<compile_context>
chip_gen: v7x
topology: tpu7x:2x2x1
jax: 0.10.0
libtpu: 0.0.40
codegen_flags: <defaults>
</compile_context>

<pallas_src>
import math
from functools import partial

import jax
import jax.numpy as jnp
from jax.experimental import pallas as pl
from jax.experimental.pallas import tpu as pltpu

_MASK_VALUE = -1e30                      # finite "−inf" (NaN-safe under exp)
_GELU_C = math.sqrt(2.0 / math.pi)
_VMEM_LIMIT = 32 * 1024 * 1024


def _round_up(x, m):
    return (x + m - 1) // m * m


def _pad_to(a, shape):
    pads = tuple((0, s - d) for d, s in zip(a.shape, shape))
    if all(p == (0, 0) for p in pads):
        return a
    return jnp.pad(a, pads)


# ----------------------------------------------------------------------------
# Tiled linear:  y = x @ w (+ bias) (tanh-GELU) (+ residual)
# ----------------------------------------------------------------------------

def _linear_kernel(*refs, nk, has_bias, has_res, use_gelu):
    x_ref, w_ref = refs[0], refs[1]
    idx = 2
    b_ref = refs[idx] if has_bias else None
    idx += int(has_bias)
    r_ref = refs[idx] if has_res else None
    idx += int(has_res)
    o_ref, acc_ref = refs[idx], refs[idx + 1]

    k = pl.program_id(2)

    @pl.when(k == 0)
    def _():
        acc_ref[...] = jnp.zeros_like(acc_ref)

    acc_ref[...] += jnp.dot(
        x_ref[...].astype(jnp.bfloat16),       # bf16 MXU inputs,
        w_ref[...].astype(jnp.bfloat16),       # f32 accumulation
        preferred_element_type=jnp.float32,
    )

    @pl.when(k == nk - 1)
    def _():
        y = acc_ref[...]
        if has_bias:
            y = y + b_ref[...].astype(jnp.float32)
        if use_gelu:                           # GELU(tanh) fused, f32 VPU/EUP
            y = 0.5 * y * (1.0 + jnp.tanh(_GELU_C * (y + 0.044715 * y * y * y)))
        if has_res:                            # residual add fused in epilogue
            y = y + r_ref[...].astype(jnp.float32)
        o_ref[...] = y.astype(o_ref.dtype)


def linear(x2d, w, b=None, *, residual=None, use_gelu=False,
           out_dtype=jnp.bfloat16, tm=256, tn=256, tk=512):
    """x2d: (M, K), w: (K, N), optional b: (N,), optional residual: (M, N)."""
    M, K = x2d.shape
    N = w.shape[1]

    tm = min(tm, _round_up(M, 8))
    tk = min(tk, _round_up(K, 128))
    tn = min(tn, _round_up(N, 128))
    Mp, Kp, Np = _round_up(M, tm), _round_up(K, tk), _round_up(N, tn)
    nk = Kp // tk

    operands = [_pad_to(x2d, (Mp, Kp)), _pad_to(w, (Kp, Np))]
    in_specs = [
        pl.BlockSpec((tm, tk), lambda i, j, k: (i, k)),
        pl.BlockSpec((tk, tn), lambda i, j, k: (k, j)),
    ]
    has_bias = b is not None
    if has_bias:
        operands.append(_pad_to(b.reshape(1, N), (1, Np)))
        in_specs.append(pl.BlockSpec((1, tn), lambda i, j, k: (0, j)))
    has_res = residual is not None
    if has_res:
        operands.append(_pad_to(residual, (Mp, Np)))
        in_specs.append(pl.BlockSpec((tm, tn), lambda i, j, k: (i, j)))

    out = pl.pallas_call(
        partial(_linear_kernel, nk=nk, has_bias=has_bias,
                has_res=has_res, use_gelu=use_gelu),
        out_shape=jax.ShapeDtypeStruct((Mp, Np), out_dtype),
        grid=(Mp // tm, Np // tn, nk),
        in_specs=in_specs,
        out_specs=pl.BlockSpec((tm, tn), lambda i, j, k: (i, j)),
        scratch_shapes=[pltpu.VMEM((tm, tn), jnp.float32)],
        compiler_params=pltpu.CompilerParams(
            dimension_semantics=("parallel", "parallel", "arbitrary"),
            vmem_limit_bytes=_VMEM_LIMIT),
    )(*operands)

    if (Mp, Np) != (M, N):
        out = out[:M, :N]
    return out


# ----------------------------------------------------------------------------
# Row-tiled LayerNorm (stats in f32)
# ----------------------------------------------------------------------------

def _layernorm_kernel(x_ref, g_ref, b_ref, o_ref, *, eps):
    x = x_ref[...].astype(jnp.float32)
    mu = jnp.mean(x, axis=-1, keepdims=True)
    var = jnp.mean(jnp.square(x - mu), axis=-1, keepdims=True)
    xn = (x - mu) * jax.lax.rsqrt(var + eps)
    y = xn * g_ref[...].astype(jnp.float32) + b_ref[...].astype(jnp.float32)
    o_ref[...] = y.astype(o_ref.dtype)


def layernorm(x2d, gamma, beta, *, out_dtype=jnp.bfloat16, tm=512, eps=1e-5):
    M, C = x2d.shape
    tm = min(tm, _round_up(M, 8))
    Mp = _round_up(M, tm)
    xp = _pad_to(x2d, (Mp, C))

    out = pl.pallas_call(
        partial(_layernorm_kernel, eps=eps),
        out_shape=jax.ShapeDtypeStruct((Mp, C), out_dtype),
        grid=(Mp // tm,),
        in_specs=[
            pl.BlockSpec((tm, C), lambda i: (i, 0)),
            pl.BlockSpec((1, C), lambda i: (0, 0)),
            pl.BlockSpec((1, C), lambda i: (0, 0)),
        ],
        out_specs=pl.BlockSpec((tm, C), lambda i: (i, 0)),
        compiler_params=pltpu.CompilerParams(
            dimension_semantics=("parallel",),
            vmem_limit_bytes=_VMEM_LIMIT),
    )(xp, gamma.reshape(1, C), beta.reshape(1, C))

    if Mp != M:
        out = out[:M]
    return out


# ----------------------------------------------------------------------------
# Flash-style causal self-attention (online softmax, causal block skipping)
# ----------------------------------------------------------------------------

def _flash_attn_kernel(q_ref, k_ref, v_ref, o_ref, m_sc, l_sc, acc_sc,
                       *, scale, blk):
    qi = pl.program_id(1)
    ki = pl.program_id(2)

    @pl.when(ki == 0)
    def _():
        m_sc[...] = jnp.full_like(m_sc, _MASK_VALUE)
        l_sc[...] = jnp.zeros_like(l_sc)
        acc_sc[...] = jnp.zeros_like(acc_sc)

    # Skip KV blocks that are entirely above the causal diagonal.
    @pl.when(ki <= qi)
    def _():
        s = jnp.einsum("bqd,bkd->bqk", q_ref[...], k_ref[...],
                       preferred_element_type=jnp.float32) * scale  # (1,blk,blk)
        rows = qi * blk + jax.lax.broadcasted_iota(jnp.int32, (blk, blk), 0)
        cols = ki * blk + jax.lax.broadcasted_iota(jnp.int32, (blk, blk), 1)
        s = jnp.where((cols <= rows)[None], s, _MASK_VALUE)

        m_prev = m_sc[...]
        m_new = jnp.maximum(m_prev, jnp.max(s, axis=-1, keepdims=True))
        alpha = jnp.exp(m_prev - m_new)
        p = jnp.exp(s - m_new)
        l_sc[...] = alpha * l_sc[...] + jnp.sum(p, axis=-1, keepdims=True)
        acc_sc[...] = alpha * acc_sc[...] + jnp.einsum(
            "bqk,bkd->bqd", p.astype(v_ref.dtype), v_ref[...],
            preferred_element_type=jnp.float32)
        m_sc[...] = m_new

    @pl.when(ki == pl.num_programs(2) - 1)
    def _():
        l = l_sc[...]
        inv = pl.reciprocal(jnp.where(l == 0.0, 1.0, l), approx=True)
        o_ref[...] = (acc_sc[...] * inv).astype(o_ref.dtype)


def attention(q, k, v, *, blk=128):
    """q, k, v: (B*H, T, hd) -> (B*H, T, hd)   (causal)."""
    BH, T, hd = q.shape
    scale = 1.0 / math.sqrt(hd)
    blk = min(blk, T)
    Tp = _round_up(T, blk)
    if Tp != T:
        # Padded key columns sit above the causal diagonal -> masked out;
        # padded query rows are sliced off below.
        q = _pad_to(q, (BH, Tp, hd))
        k = _pad_to(k, (BH, Tp, hd))
        v = _pad_to(v, (BH, Tp, hd))
    nblk = Tp // blk
    qspec = pl.BlockSpec((1, blk, hd), lambda b, qi, ki: (b, qi, 0))
    kvspec = pl.BlockSpec((1, blk, hd), lambda b, qi, ki: (b, ki, 0))

    out = pl.pallas_call(
        partial(_flash_attn_kernel, scale=scale, blk=blk),
        out_shape=jax.ShapeDtypeStruct((BH, Tp, hd), jnp.bfloat16),
        grid=(BH, nblk, nblk),
        in_specs=[qspec, kvspec, kvspec],
        out_specs=pl.BlockSpec((1, blk, hd), lambda b, qi, ki: (b, qi, 0)),
        scratch_shapes=[
            pltpu.VMEM((1, blk, 1), jnp.float32),   # running max m
            pltpu.VMEM((1, blk, 1), jnp.float32),   # running sum l
            pltpu.VMEM((1, blk, hd), jnp.float32),  # output accumulator
        ],
        compiler_params=pltpu.CompilerParams(
            dimension_semantics=("parallel", "parallel", "arbitrary"),
            vmem_limit_bytes=_VMEM_LIMIT),
    )(q, k, v)

    if Tp != T:
        out = out[:, :T, :]
    return out


# ----------------------------------------------------------------------------
# Model glue (plain JAX): embeddings, head split/merge, parameter bookkeeping
# ----------------------------------------------------------------------------

def block_forward(p, x, n_head):
    B, T, C = x.shape
    hd = C // n_head
    M = B * T
    x2 = x.reshape(M, C)                                        # f32 residual

    # --- attention sub-block ---
    h = layernorm(x2, p["ln1_g"], p["ln1_b"])                   # bf16
    qkv = linear(h, p["attn_w"], p["attn_b"])                   # (M, 3C) bf16
    # TODO(synk): gather the per-head Q/K/V stripes via the attention
    # BlockSpec index_map instead of this XLA transpose round-trip.
    qkv = qkv.reshape(B, T, 3, n_head, hd).transpose(2, 0, 3, 1, 4)
    q = qkv[0].reshape(B * n_head, T, hd)
    k = qkv[1].reshape(B * n_head, T, hd)
    v = qkv[2].reshape(B * n_head, T, hd)
    y = attention(q, k, v)                                      # (BH, T, hd)
    y = y.reshape(B, n_head, T, hd).transpose(0, 2, 1, 3).reshape(M, C)
    x2 = linear(y, p["attn_proj_w"], p["attn_proj_b"],
                residual=x2, out_dtype=jnp.float32)             # residual fused

    # --- MLP sub-block ---
    h2 = layernorm(x2, p["ln2_g"], p["ln2_b"])
    h2 = linear(h2, p["fc_w"], p["fc_b"], use_gelu=True)        # GELU fused
    x2 = linear(h2, p["proj_w"], p["proj_b"],
                residual=x2, out_dtype=jnp.float32)             # residual fused
    return x2.reshape(B, T, C)


def gpt_forward(params, idx, n_head):
    B, T = idx.shape
    C = params["wte"].shape[1]

    # Embedding lookups (gather) kept in plain JAX glue.
    tok = jnp.take(params["wte"], idx, axis=0)                  # (B, T, C)
    pos = params["wpe"][:T][None, :, :]
    x = (tok + pos).astype(jnp.float32)

    for blk in params["blocks"]:
        x = block_forward(blk, x, n_head)

    xf = layernorm(x.reshape(B * T, C), params["ln_f_g"], params["ln_f_b"])
    logits = linear(xf, params["lm_head_w"], None,              # no bias
                    out_dtype=jnp.float32, tn=512)
    return logits.reshape(B, T, -1)


# ----------------------------------------------------------------------------
# Deterministic parameter init (matmul weights in bf16, norms/bias in f32)
# ----------------------------------------------------------------------------

def init_params(key, *, vocab_size, block_size, n_layer, n_embed):
    C = n_embed

    def nrm(k, shape, dtype=jnp.float32):
        return (0.02 * jax.random.normal(k, shape)).astype(dtype)

    keys = jax.random.split(key, 3 + n_layer)
    params = {
        "wte": nrm(keys[0], (vocab_size, C)),
        "wpe": nrm(keys[1], (block_size, C)),
        "lm_head_w": nrm(keys[2], (C, vocab_size), jnp.bfloat16),
        "ln_f_g": jnp.ones((C,), jnp.float32),
        "ln_f_b": jnp.zeros((C,), jnp.float32),
        "blocks": [],
    }
    for li in range(n_layer):
        ks = jax.random.split(keys[3 + li], 4)
        params["blocks"].append({
            "ln1_g": jnp.ones((C,), jnp.float32),
            "ln1_b": jnp.zeros((C,), jnp.float32),
            "attn_w": nrm(ks[0], (C, 3 * C), jnp.bfloat16),
            "attn_b": jnp.zeros((3 * C,), jnp.float32),
            "attn_proj_w": nrm(ks[1], (C, C), jnp.bfloat16),
            "attn_proj_b": jnp.zeros((C,), jnp.float32),
            "ln2_g": jnp.ones((C,), jnp.float32),
            "ln2_b": jnp.zeros((C,), jnp.float32),
            "fc_w": nrm(ks[2], (C, 4 * C), jnp.bfloat16),
            "fc_b": jnp.zeros((4 * C,), jnp.float32),
            "proj_w": nrm(ks[3], (4 * C, C), jnp.bfloat16),
            "proj_b": jnp.zeros((C,), jnp.float32),
        })
    return params


# ----------------------------------------------------------------------------
# main
# ----------------------------------------------------------------------------

if __name__ == "__main__":
    # Small GPT config consistent with GPTConfig semantics.
    VOCAB = 128
    BLOCK_SIZE = 16
    N_LAYER = 2
    N_HEAD = 4
    N_EMBED = 32
    B, T = 2, 8

    key = jax.random.PRNGKey(0)
    pkey, ikey = jax.random.split(key)
    params = init_params(pkey, vocab_size=VOCAB, block_size=BLOCK_SIZE,
                         n_layer=N_LAYER, n_embed=N_EMBED)
    idx = jax.random.randint(ikey, (B, T), 0, VOCAB, dtype=jnp.int32)

    fwd = jax.jit(partial(gpt_forward, n_head=N_HEAD))
    logits = fwd(params, idx)
    jax.block_until_ready(logits)

    assert logits.shape == (B, T, VOCAB), logits.shape
    assert logits.dtype == jnp.float32
    assert bool(jnp.all(jnp.isfinite(logits)))
    print("KERNEL_OK")
</pallas_src>

<mosaic_0001>
module attributes {stable_mosaic.version = 11 : i64} {
  func.func @_layernorm_kernel(%arg0: i32, %arg1: memref<16x32xf32, #tpu.memory_space<vmem>>, %arg2: memref<1x32xf32, #tpu.memory_space<vmem>>, %arg3: memref<1x32xf32, #tpu.memory_space<vmem>>, %arg4: memref<16x32xbf16, #tpu.memory_space<vmem>>) attributes {dimension_semantics = [#tpu.dimension_semantics<parallel>], iteration_bounds = array<i64: 1>, scalar_prefetch = 0 : i64, scratch_operands = 0 : i64, tpu.core_type = #tpu.core_type<tc>, window_params = [{transform_indices = @transform_0, window_bounds = array<i64: 16, 32>}, {pipeline_mode = #tpu.pipeline_mode<synchronous>, transform_indices = @transform_1, window_bounds = array<i64: 1, 32>}, {pipeline_mode = #tpu.pipeline_mode<synchronous>, transform_indices = @transform_2, window_bounds = array<i64: 1, 32>}, {transform_indices = @transform_3, window_bounds = array<i64: 16, 32>}]} {
    %c0 = arith.constant 0 : index
    %c0_0 = arith.constant 0 : index
    %0 = vector.load %arg1[%c0, %c0_0] : memref<16x32xf32, #tpu.memory_space<vmem>>, vector<16x32xf32>
    %cst = arith.constant dense<0.000000e+00> : vector<16xf32>
    %1 = vector.multi_reduction <add>, %0, %cst [1] : vector<16x32xf32> to vector<16xf32>
    %2 = vector.shape_cast %1 : vector<16xf32> to vector<16x1xf32>
    %cst_1 = arith.constant 3.200000e+01 : f32
    %3 = vector.broadcast %cst_1 : f32 to vector<16x1xf32>
    %4 = arith.divf %2, %3 : vector<16x1xf32>
    %5 = vector.broadcast %4 : vector<16x1xf32> to vector<16x32xf32>
    %6 = arith.subf %0, %5 : vector<16x32xf32>
    %7 = arith.mulf %6, %6 : vector<16x32xf32>
    %cst_2 = arith.constant dense<0.000000e+00> : vector<16xf32>
    %8 = vector.multi_reduction <add>, %7, %cst_2 [1] : vector<16x32xf32> to vector<16xf32>
    %9 = vector.shape_cast %8 : vector<16xf32> to vector<16x1xf32>
    %cst_3 = arith.constant 3.200000e+01 : f32
    %10 = vector.broadcast %cst_3 : f32 to vector<16x1xf32>
    %11 = arith.divf %9, %10 : vector<16x1xf32>
    %12 = vector.broadcast %4 : vector<16x1xf32> to vector<16x32xf32>
    %13 = arith.subf %0, %12 : vector<16x32xf32>
    %cst_4 = arith.constant 9.99999974E-6 : f32
    %14 = vector.broadcast %cst_4 : f32 to vector<16x1xf32>
    %15 = arith.addf %11, %14 : vector<16x1xf32>
    %16 = math.rsqrt %15 : vector<16x1xf32>
    %17 = vector.broadcast %16 : vector<16x1xf32> to vector<16x32xf32>
    %18 = arith.mulf %13, %17 : vector<16x32xf32>
    %c0_5 = arith.constant 0 : index
    %c0_6 = arith.constant 0 : index
    %19 = vector.load %arg2[%c0_5, %c0_6] : memref<1x32xf32, #tpu.memory_space<vmem>>, vector<1x32xf32>
    %20 = vector.broadcast %19 : vector<1x32xf32> to vector<16x32xf32>
    %21 = arith.mulf %18, %20 : vector<16x32xf32>
    %c0_7 = arith.constant 0 : index
    %c0_8 = arith.constant 0 : index
    %22 = vector.load %arg3[%c0_7, %c0_8] : memref<1x32xf32, #tpu.memory_space<vmem>>, vector<1x32xf32>
    %23 = vector.broadcast %22 : vector<1x32xf32> to vector<16x32xf32>
    %24 = arith.addf %21, %23 : vector<16x32xf32>
    %25 = arith.truncf %24 : vector<16x32xf32> to vector<16x32xbf16>
    %c0_9 = arith.constant 0 : index
    %c0_10 = arith.constant 0 : index
    %26 = vector.load %arg4[%c0_9, %c0_10] : memref<16x32xbf16, #tpu.memory_space<vmem>>, vector<16x32xbf16>
    tpu.vector_store %arg4[%c0_9, %c0_10], %25 {strides = array<i32>} : memref<16x32xbf16, #tpu.memory_space<vmem>>, vector<16x32xbf16>,
    return
  }
  func.func @transform_0(%arg0: i32) -> (i32, i32) {
    %c0_i32 = arith.constant 0 : i32
    %c0_i32_0 = arith.constant 0 : i32
    return %arg0, %c0_i32 : i32, i32
  }
  func.func @transform_1(%arg0: i32) -> (i32, i32) {
    %c0_i32 = arith.constant 0 : i32
    %c0_i32_0 = arith.constant 0 : i32
    %c0_i32_1 = arith.constant 0 : i32
    return %c0_i32, %c0_i32_0 : i32, i32
  }
  func.func @transform_2(%arg0: i32) -> (i32, i32) {
    %c0_i32 = arith.constant 0 : i32
    %c0_i32_0 = arith.constant 0 : i32
    %c0_i32_1 = arith.constant 0 : i32
    return %c0_i32, %c0_i32_0 : i32, i32
  }
  func.func @transform_3(%arg0: i32) -> (i32, i32) {
    %c0_i32 = arith.constant 0 : i32
    %c0_i32_0 = arith.constant 0 : i32
    return %arg0, %c0_i32 : i32, i32
  }
}

module attributes {stable_mosaic.version = 11 : i64} {
  func.func @_linear_kernel(%arg0: i32, %arg1: i32, %arg2: i32, %arg3: memref<16x128xbf16, #tpu.memory_space<vmem>>, %arg4: memref<128x128xbf16, #tpu.memory_space<vmem>>, %arg5: memref<1x128xf32, #tpu.memory_space<vmem>>, %arg6: memref<16x128xbf16, #tpu.memory_space<vmem>>, %arg7: memref<16x128xf32, #tpu.memory_space<vmem>>) attributes {dimension_semantics = [#tpu.dimension_semantics<parallel>, #tpu.dimension_semantics<parallel>, #tpu.dimension_semantics<arbitrary>], iteration_bounds = array<i64: 1, 1, 1>, scalar_prefetch = 0 : i64, scratch_operands = 1 : i64, tpu.core_type = #tpu.core_type<tc>, window_params = [{transform_indices = @transform_0, window_bounds = array<i64: 16, 128>}, {transform_indices = @transform_1, window_bounds = array<i64: 128, 128>}, {transform_indices = @transform_2, window_bounds = array<i64: 1, 128>}, {transform_indices = @transform_3, window_bounds = array<i64: 16, 128>}]} {
    %c0_i32 = arith.constant 0 : i32
    %0 = arith.cmpi eq, %arg2, %c0_i32 : i32
    %1 = arith.extui %0 : i1 to i32
    %c0_i32_0 = arith.constant 0 : i32
    %2 = arith.cmpi ne, %1, %c0_i32_0 : i32
    scf.if %2 {
      %cst_10 = arith.constant 0.000000e+00 : f32
      %12 = vector.broadcast %cst_10 : f32 to vector<16x128xf32>
      %c0_11 = arith.constant 0 : index
      %c0_12 = arith.constant 0 : index
      %13 = vector.load %arg7[%c0_11, %c0_12] : memref<16x128xf32, #tpu.memory_space<vmem>>, vector<16x128xf32>
      tpu.vector_store %arg7[%c0_11, %c0_12], %12 {strides = array<i32>} : memref<16x128xf32, #tpu.memory_space<vmem>>, vector<16x128xf32>,
    } else {
    }
    %c0 = arith.constant 0 : index
    %c0_1 = arith.constant 0 : index
    %3 = vector.load %arg7[%c0, %c0_1] : memref<16x128xf32, #tpu.memory_space<vmem>>, vector<16x128xf32>
    %c0_2 = arith.constant 0 : index
    %c0_3 = arith.constant 0 : index
    %4 = vector.load %arg3[%c0_2, %c0_3] : memref<16x128xbf16, #tpu.memory_space<vmem>>, vector<16x128xbf16>
    %c0_4 = arith.constant 0 : index
    %c0_5 = arith.constant 0 : index
    %5 = vector.load %arg4[%c0_4, %c0_5] : memref<128x128xbf16, #tpu.memory_space<vmem>>, vector<128x128xbf16>
    %cst = arith.constant dense<0.000000e+00> : vector<16x128xf32>
    %6 = tpu.matmul %4, %5, %cst {dimension_numbers = #tpu.dot_dimension_numbers<[1], [0], [0], [1], [0, 0, 1, 1], [], []>} : vector<16x128xbf16>, vector<128x128xbf16>, vector<16x128xf32> -> vector<16x128xf32>
    %7 = arith.addf %3, %6 : vector<16x128xf32>
    %c0_6 = arith.constant 0 : index
    %c0_7 = arith.constant 0 : index
    %8 = vector.load %arg7[%c0_6, %c0_7] : memref<16x128xf32, #tpu.memory_space<vmem>>, vector<16x128xf32>
    tpu.vector_store %arg7[%c0_6, %c0_7], %7 {strides = array<i32>} : memref<16x128xf32, #tpu.memory_space<vmem>>, vector<16x128xf32>,
    %c0_i32_8 = arith.constant 0 : i32
    %9 = arith.cmpi eq, %arg2, %c0_i32_8 : i32
    %10 = arith.extui %9 : i1 to i32
    %c0_i32_9 = arith.constant 0 : i32
    %11 = arith.cmpi ne, %10, %c0_i32_9 : i32
    scf.if %11 {
      %c0_10 = arith.constant 0 : index
      %c0_11 = arith.constant 0 : index
      %12 = vector.load %arg7[%c0_10, %c0_11] : memref<16x128xf32, #tpu.memory_space<vmem>>, vector<16x128xf32>
      %c0_12 = arith.constant 0 : index
      %c0_13 = arith.constant 0 : index
      %13 = vector.load %arg5[%c0_12, %c0_13] : memref<1x128xf32, #tpu.memory_space<vmem>>, vector<1x128xf32>
      %14 = vector.broadcast %13 : vector<1x128xf32> to vector<16x128xf32>
      %15 = arith.addf %12, %14 : vector<16x128xf32>
      %16 = arith.truncf %15 : vector<16x128xf32> to vector<16x128xbf16>
      %c0_14 = arith.constant 0 : index
      %c0_15 = arith.constant 0 : index
      %17 = vector.load %arg6[%c0_14, %c0_15] : memref<16x128xbf16, #tpu.memory_space<vmem>>, vector<16x128xbf16>
      tpu.vector_store %arg6[%c0_14, %c0_15], %16 {strides = array<i32>} : memref<16x128xbf16, #tpu.memory_space<vmem>>, vector<16x128xbf16>,
    } else {
    }
    return
  }
  func.func @transform_0(%arg0: i32, %arg1: i32, %arg2: i32) -> (i32, i32) {
    %c0_i32 = arith.constant 0 : i32
    return %arg0, %arg2 : i32, i32
  }
  func.func @transform_1(%arg0: i32, %arg1: i32, %arg2: i32) -> (i32, i32) {
    %c0_i32 = arith.constant 0 : i32
    return %arg2, %arg1 : i32, i32
  }
  func.func @transform_2(%arg0: i32, %arg1: i32, %arg2: i32) -> (i32, i32) {
    %c0_i32 = arith.constant 0 : i32
    %c0_i32_0 = arith.constant 0 : i32
    return %c0_i32, %arg1 : i32, i32
  }
  func.func @transform_3(%arg0: i32, %arg1: i32, %arg2: i32) -> (i32, i32) {
    %c0_i32 = arith.constant 0 : i32
    return %arg0, %arg1 : i32, i32
  }
}

module attributes {stable_mosaic.version = 11 : i64} {
  func.func @_flash_attn_kernel(%arg0: i32, %arg1: i32, %arg2: i32, %arg3: memref<1x8x8xbf16, #tpu.memory_space<vmem>>, %arg4: memref<1x8x8xbf16, #tpu.memory_space<vmem>>, %arg5: memref<1x8x8xbf16, #tpu.memory_space<vmem>>, %arg6: memref<1x8x8xbf16, #tpu.memory_space<vmem>>, %arg7: memref<1x8x1xf32, #tpu.memory_space<vmem>>, %arg8: memref<1x8x1xf32, #tpu.memory_space<vmem>>, %arg9: memref<1x8x8xf32, #tpu.memory_space<vmem>>) attributes {dimension_semantics = [#tpu.dimension_semantics<parallel>, #tpu.dimension_semantics<parallel>, #tpu.dimension_semantics<arbitrary>], iteration_bounds = array<i64: 8, 1, 1>, scalar_prefetch = 0 : i64, scratch_operands = 3 : i64, tpu.core_type = #tpu.core_type<tc>, window_params = [{transform_indices = @transform_0, window_bounds = array<i64: 1, 8, 8>}, {transform_indices = @transform_1, window_bounds = array<i64: 1, 8, 8>}, {transform_indices = @transform_2, window_bounds = array<i64: 1, 8, 8>}, {transform_indices = @transform_3, window_bounds = array<i64: 1, 8, 8>}]} {
    %c0_i32 = arith.constant 0 : i32
    %0 = arith.cmpi eq, %arg2, %c0_i32 : i32
    %1 = arith.extui %0 : i1 to i32
    %c0_i32_0 = arith.constant 0 : i32
    %2 = arith.cmpi ne, %1, %c0_i32_0 : i32
    scf.if %2 {
      %cst = arith.constant -1.000000e+30 : f32
      %9 = vector.broadcast %cst : f32 to vector<1x8x1xf32>
      %c0 = arith.constant 0 : index
      %c0_4 = arith.constant 0 : index
      %c0_5 = arith.constant 0 : index
      %10 = vector.load %arg7[%c0, %c0_4, %c0_5] : memref<1x8x1xf32, #tpu.memory_space<vmem>>, vector<1x8x1xf32>
      tpu.vector_store %arg7[%c0, %c0_4, %c0_5], %9 {strides = array<i32>} : memref<1x8x1xf32, #tpu.memory_space<vmem>>, vector<1x8x1xf32>,
      %cst_6 = arith.constant 0.000000e+00 : f32
      %11 = vector.broadcast %cst_6 : f32 to vector<1x8x1xf32>
      %c0_7 = arith.constant 0 : index
      %c0_8 = arith.constant 0 : index
      %c0_9 = arith.constant 0 : index
      %12 = vector.load %arg8[%c0_7, %c0_8, %c0_9] : memref<1x8x1xf32, #tpu.memory_space<vmem>>, vector<1x8x1xf32>
      tpu.vector_store %arg8[%c0_7, %c0_8, %c0_9], %11 {strides = array<i32>} : memref<1x8x1xf32, #tpu.memory_space<vmem>>, vector<1x8x1xf32>,
      %cst_10 = arith.constant 0.000000e+00 : f32
      %13 = vector.broadcast %cst_10 : f32 to vector<1x8x8xf32>
      %c0_11 = arith.constant 0 : index
      %c0_12 = arith.constant 0 : index
      %c0_13 = arith.constant 0 : index
      %14 = vector.load %arg9[%c0_11, %c0_12, %c0_13] : memref<1x8x8xf32, #tpu.memory_space<vmem>>, vector<1x8x8xf32>
      tpu.vector_store %arg9[%c0_11, %c0_12, %c0_13], %13 {strides = array<i32>} : memref<1x8x8xf32, #tpu.memory_space<vmem>>, vector<1x8x8xf32>,
    } else {
    }
    %3 = arith.cmpi sle, %arg2, %arg1 : i32
    %4 = arith.extui %3 : i1 to i32
    %c0_i32_1 = arith.constant 0 : i32
    %5 = arith.cmpi ne, %4, %c0_i32_1 : i32
    scf.if %5 {
      %c0 = arith.constant 0 : index
      %c0_4 = arith.constant 0 : index
      %c0_5 = arith.constant 0 : index
      %9 = vector.load %arg3[%c0, %c0_4, %c0_5] : memref<1x8x8xbf16, #tpu.memory_space<vmem>>, vector<1x8x8xbf16>
      %c0_6 = arith.constant 0 : index
      %c0_7 = arith.constant 0 : index
      %c0_8 = arith.constant 0 : index
      %10 = vector.load %arg4[%c0_6, %c0_7, %c0_8] : memref<1x8x8xbf16, #tpu.memory_space<vmem>>, vector<1x8x8xbf16>
      "tpu.trace_start"() <{level = 10 : i32, message = "bqd,bkd->bqk"}> : () -> ()
      %cst = arith.constant dense<0.000000e+00> : vector<1x8x8xf32>
      %11 = tpu.matmul %9, %10, %cst {dimension_numbers = #tpu.dot_dimension_numbers<[2], [2], [1], [1], [0, 0, 0, 1, 1, 1], [0], [0]>} : vector<1x8x8xbf16>, vector<1x8x8xbf16>, vector<1x8x8xf32> -> vector<1x8x8xf32>
      "tpu.trace_stop"() : () -> ()
      %cst_9 = arith.constant 0.353553385 : f32
      %12 = vector.broadcast %cst_9 : f32 to vector<1x8x8xf32>
      %13 = arith.mulf %11, %12 : vector<1x8x8xf32>
      %c8_i32 = arith.constant 8 : i32
      %14 = arith.muli %arg1, %c8_i32 : i32
      %15 = tpu.iota {dimensions = array<i32: 0>} : vector<8x8xi32>
      %16 = vector.broadcast %14 : i32 to vector<8x8xi32>
      %17 = arith.addi %16, %15 : vector<8x8xi32>
      %c8_i32_10 = arith.constant 8 : i32
      %18 = arith.muli %arg2, %c8_i32_10 : i32
      %19 = tpu.iota {dimensions = array<i32: 1>} : vector<8x8xi32>
      %20 = vector.broadcast %18 : i32 to vector<8x8xi32>
      %21 = arith.addi %20, %19 : vector<8x8xi32>
      %22 = arith.cmpi sle, %21, %17 : vector<8x8xi32>
      %23 = vector.shape_cast %22 : vector<8x8xi1> to vector<1x8x8xi1>
      %cst_11 = arith.constant -1.000000e+30 : f32
      %24 = vector.broadcast %cst_11 : f32 to vector<1x8x8xf32>
      %25 = arith.select %23, %13, %24 : vector<1x8x8xi1>, vector<1x8x8xf32>
      %c0_12 = arith.constant 0 : index
      %c0_13 = arith.constant 0 : index
      %c0_14 = arith.constant 0 : index
      %26 = vector.load %arg7[%c0_12, %c0_13, %c0_14] : memref<1x8x1xf32, #tpu.memory_space<vmem>>, vector<1x8x1xf32>
      %cst_15 = arith.constant dense<0xFF800000> : vector<1x8xf32>
      %27 = vector.multi_reduction <maximumf>, %25, %cst_15 [2] : vector<1x8x8xf32> to vector<1x8xf32>
      %28 = vector.shape_cast %27 : vector<1x8xf32> to vector<1x8x1xf32>
      %29 = arith.maximumf %26, %28 : vector<1x8x1xf32>
      %30 = arith.subf %26, %29 : vector<1x8x1xf32>
      %31 = math.exp %30 : vector<1x8x1xf32>
      %32 = vector.broadcast %29 : vector<1x8x1xf32> to vector<1x8x8xf32>
      %33 = arith.subf %25, %32 : vector<1x8x8xf32>
      %34 = math.exp %33 : vector<1x8x8xf32>
      %c0_16 = arith.constant 0 : index
      %c0_17 = arith.constant 0 : index
      %c0_18 = arith.constant 0 : index
      %35 = vector.load %arg8[%c0_16, %c0_17, %c0_18] : memref<1x8x1xf32, #tpu.memory_space<vmem>>, vector<1x8x1xf32>
      %36 = arith.mulf %31, %35 : vector<1x8x1xf32>
      %cst_19 = arith.constant dense<0.000000e+00> : vector<1x8xf32>
      %37 = vector.multi_reduction <add>, %34, %cst_19 [2] : vector<1x8x8xf32> to vector<1x8xf32>
      %38 = vector.shape_cast %37 : vector<1x8xf32> to vector<1x8x1xf32>
      %39 = arith.addf %36, %38 : vector<1x8x1xf32>
      %c0_20 = arith.constant 0 : index
      %c0_21 = arith.constant 0 : index
      %c0_22 = arith.constant 0 : index
      %40 = vector.load %arg8[%c0_20, %c0_21, %c0_22] : memref<1x8x1xf32, #tpu.memory_space<vmem>>, vector<1x8x1xf32>
      tpu.vector_store %arg8[%c0_20, %c0_21, %c0_22], %39 {strides = array<i32>} : memref<1x8x1xf32, #tpu.memory_space<vmem>>, vector<1x8x1xf32>,
      %c0_23 = arith.constant 0 : index
      %c0_24 = arith.constant 0 : index
      %c0_25 = arith.constant 0 : index
      %41 = vector.load %arg9[%c0_23, %c0_24, %c0_25] : memref<1x8x8xf32, #tpu.memory_space<vmem>>, vector<1x8x8xf32>
      %42 = vector.broadcast %31 : vector<1x8x1xf32> to vector<1x8x8xf32>
      %43 = arith.mulf %42, %41 : vector<1x8x8xf32>
      %44 = arith.truncf %34 : vector<1x8x8xf32> to vector<1x8x8xbf16>
      %c0_26 = arith.constant 0 : index
      %c0_27 = arith.constant 0 : index
      %c0_28 = arith.constant 0 : index
      %45 = vector.load %arg5[%c0_26, %c0_27, %c0_28] : memref<1x8x8xbf16, #tpu.memory_space<vmem>>, vector<1x8x8xbf16>
      "tpu.trace_start"() <{level = 10 : i32, message = "bqk,bkd->bqd"}> : () -> ()
      %cst_29 = arith.constant dense<0.000000e+00> : vector<1x8x8xf32>
      %46 = tpu.matmul %44, %45, %cst_29 {dimension_numbers = #tpu.dot_dimension_numbers<[2], [1], [1], [2], [0, 0, 0, 1, 1, 2], [0], [0]>} : vector<1x8x8xbf16>, vector<1x8x8xbf16>, vector<1x8x8xf32> -> vector<1x8x8xf32>
      "tpu.trace_stop"() : () -> ()
      %47 = arith.addf %43, %46 : vector<1x8x8xf32>
      %c0_30 = arith.constant 0 : index
      %c0_31 = arith.constant 0 : index
      %c0_32 = arith.constant 0 : index
      %48 = vector.load %arg9[%c0_30, %c0_31, %c0_32] : memref<1x8x8xf32, #tpu.memory_space<vmem>>, vector<1x8x8xf32>
      tpu.vector_store %arg9[%c0_30, %c0_31, %c0_32], %47 {strides = array<i32>} : memref<1x8x8xf32, #tpu.memory_space<vmem>>, vector<1x8x8xf32>,
      %c0_33 = arith.constant 0 : index
      %c0_34 = arith.constant 0 : index
      %c0_35 = arith.constant 0 : index
      %49 = vector.load %arg7[%c0_33, %c0_34, %c0_35] : memref<1x8x1xf32, #tpu.memory_space<vmem>>, vector<1x8x1xf32>
      tpu.vector_store %arg7[%c0_33, %c0_34, %c0_35], %29 {strides = array<i32>} : memref<1x8x1xf32, #tpu.memory_space<vmem>>, vector<1x8x1xf32>,
    } else {
    }
    %c0_i32_2 = arith.constant 0 : i32
    %6 = arith.cmpi eq, %arg2, %c0_i32_2 : i32
    %7 = arith.extui %6 : i1 to i32
    %c0_i32_3 = arith.constant 0 : i32
    %8 = arith.cmpi ne, %7, %c0_i32_3 : i32
    scf.if %8 {
      %c0 = arith.constant 0 : index
      %c0_4 = arith.constant 0 : index
      %c0_5 = arith.constant 0 : index
      %9 = vector.load %arg8[%c0, %c0_4, %c0_5] : memref<1x8x1xf32, #tpu.memory_space<vmem>>, vector<1x8x1xf32>
      %cst = arith.constant 0.000000e+00 : f32
      %10 = vector.broadcast %cst : f32 to vector<1x8x1xf32>
      %11 = arith.cmpf oeq, %9, %10 : vector<1x8x1xf32>
      %cst_6 = arith.constant 1.000000e+00 : f32
      %12 = vector.broadcast %cst_6 : f32 to vector<1x8x1xf32>
      %13 = arith.select %11, %12, %9 : vector<1x8x1xi1>, vector<1x8x1xf32>
      %14 = tpu.reciprocal %13 {approx = true} : vector<1x8x1xf32> -> vector<1x8x1xf32>
      %c0_7 = arith.constant 0 : index
      %c0_8 = arith.constant 0 : index
      %c0_9 = arith.constant 0 : index
      %15 = vector.load %arg9[%c0_7, %c0_8, %c0_9] : memref<1x8x8xf32, #tpu.memory_space<vmem>>, vector<1x8x8xf32>
      %16 = vector.broadcast %14 : vector<1x8x1xf32> to vector<1x8x8xf32>
      %17 = arith.mulf %15, %16 : vector<1x8x8xf32>
      %18 = arith.truncf %17 : vector<1x8x8xf32> to vector<1x8x8xbf16>
      %c0_10 = arith.constant 0 : index
      %c0_11 = arith.constant 0 : index
      %c0_12 = arith.constant 0 : index
      %19 = vector.load %arg6[%c0_10, %c0_11, %c0_12] : memref<1x8x8xbf16, #tpu.memory_space<vmem>>, vector<1x8x8xbf16>
      tpu.vector_store %arg6[%c0_10, %c0_11, %c0_12], %18 {strides = array<i32>} : memref<1x8x8xbf16, #tpu.memory_space<vmem>>, vector<1x8x8xbf16>,
    } else {
    }
    return
  }
  func.func @transform_0(%arg0: i32, %arg1: i32, %arg2: i32) -> (i32, i32, i32) {
    %c0_i32 = arith.constant 0 : i32
    %c0_i32_0 = arith.constant 0 : i32
    return %arg0, %arg1, %c0_i32 : i32, i32, i32
  }
  func.func @transform_1(%arg0: i32, %arg1: i32, %arg2: i32) -> (i32, i32, i32) {
    %c0_i32 = arith.constant 0 : i32
    %c0_i32_0 = arith.constant 0 : i32
    return %arg0, %arg2, %c0_i32 : i32, i32, i32
  }
  func.func @transform_2(%arg0: i32, %arg1: i32, %arg2: i32) -> (i32, i32, i32) {
    %c0_i32 = arith.constant 0 : i32
    %c0_i32_0 = arith.constant 0 : i32
    return %arg0, %arg2, %c0_i32 : i32, i32, i32
  }
  func.func @transform_3(%arg0: i32, %arg1: i32, %arg2: i32) -> (i32, i32, i32) {
    %c0_i32 = arith.constant 0 : i32
    %c0_i32_0 = arith.constant 0 : i32
    return %arg0, %arg1, %c0_i32 : i32, i32, i32
  }
}

module attributes {stable_mosaic.version = 11 : i64} {
  func.func @_linear_kernel(%arg0: i32, %arg1: i32, %arg2: i32, %arg3: memref<16x128xbf16, #tpu.memory_space<vmem>>, %arg4: memref<128x128xbf16, #tpu.memory_space<vmem>>, %arg5: memref<1x128xf32, #tpu.memory_space<vmem>>, %arg6: memref<16x128xf32, #tpu.memory_space<vmem>>, %arg7: memref<16x128xf32, #tpu.memory_space<vmem>>, %arg8: memref<16x128xf32, #tpu.memory_space<vmem>>) attributes {dimension_semantics = [#tpu.dimension_semantics<parallel>, #tpu.dimension_semantics<parallel>, #tpu.dimension_semantics<arbitrary>], iteration_bounds = array<i64: 1, 1, 1>, scalar_prefetch = 0 : i64, scratch_operands = 1 : i64, tpu.core_type = #tpu.core_type<tc>, window_params = [{transform_indices = @transform_0, window_bounds = array<i64: 16, 128>}, {transform_indices = @transform_1, window_bounds = array<i64: 128, 128>}, {transform_indices = @transform_2, window_bounds = array<i64: 1, 128>}, {transform_indices = @transform_3, window_bounds = array<i64: 16, 128>}, {transform_indices = @transform_4, window_bounds = array<i64: 16, 128>}]} {
    %c0_i32 = arith.constant 0 : i32
    %0 = arith.cmpi eq, %arg2, %c0_i32 : i32
    %1 = arith.extui %0 : i1 to i32
    %c0_i32_0 = arith.constant 0 : i32
    %2 = arith.cmpi ne, %1, %c0_i32_0 : i32
    scf.if %2 {
      %cst_10 = arith.constant 0.000000e+00 : f32
      %12 = vector.broadcast %cst_10 : f32 to vector<16x128xf32>
      %c0_11 = arith.constant 0 : index
      %c0_12 = arith.constant 0 : index
      %13 = vector.load %arg8[%c0_11, %c0_12] : memref<16x128xf32, #tpu.memory_space<vmem>>, vector<16x128xf32>
      tpu.vector_store %arg8[%c0_11, %c0_12], %12 {strides = array<i32>} : memref<16x128xf32, #tpu.memory_space<vmem>>, vector<16x128xf32>,
    } else {
    }
    %c0 = arith.constant 0 : index
    %c0_1 = arith.constant 0 : index
    %3 = vector.load %arg8[%c0, %c0_1] : memref<16x128xf32, #tpu.memory_space<vmem>>, vector<16x128xf32>
    %c0_2 = arith.constant 0 : index
    %c0_3 = arith.constant 0 : index
    %4 = vector.load %arg3[%c0_2, %c0_3] : memref<16x128xbf16, #tpu.memory_space<vmem>>, vector<16x128xbf16>
    %c0_4 = arith.constant 0 : index
    %c0_5 = arith.constant 0 : index
    %5 = vector.load %arg4[%c0_4, %c0_5] : memref<128x128xbf16, #tpu.memory_space<vmem>>, vector<128x128xbf16>
    %cst = arith.constant dense<0.000000e+00> : vector<16x128xf32>
    %6 = tpu.matmul %4, %5, %cst {dimension_numbers = #tpu.dot_dimension_numbers<[1], [0], [0], [1], [0, 0, 1, 1], [], []>} : vector<16x128xbf16>, vector<128x128xbf16>, vector<16x128xf32> -> vector<16x128xf32>
    %7 = arith.addf %3, %6 : vector<16x128xf32>
    %c0_6 = arith.constant 0 : index
    %c0_7 = arith.constant 0 : index
    %8 = vector.load %arg8[%c0_6, %c0_7] : memref<16x128xf32, #tpu.memory_space<vmem>>, vector<16x128xf32>
    tpu.vector_store %arg8[%c0_6, %c0_7], %7 {strides = array<i32>} : memref<16x128xf32, #tpu.memory_space<vmem>>, vector<16x128xf32>,
    %c0_i32_8 = arith.constant 0 : i32
    %9 = arith.cmpi eq, %arg2, %c0_i32_8 : i32
    %10 = arith.extui %9 : i1 to i32
    %c0_i32_9 = arith.constant 0 : i32
    %11 = arith.cmpi ne, %10, %c0_i32_9 : i32
    scf.if %11 {
      %c0_10 = arith.constant 0 : index
      %c0_11 = arith.constant 0 : index
      %12 = vector.load %arg8[%c0_10, %c0_11] : memref<16x128xf32, #tpu.memory_space<vmem>>, vector<16x128xf32>
      %c0_12 = arith.constant 0 : index
      %c0_13 = arith.constant 0 : index
      %13 = vector.load %arg5[%c0_12, %c0_13] : memref<1x128xf32, #tpu.memory_space<vmem>>, vector<1x128xf32>
      %14 = vector.broadcast %13 : vector<1x128xf32> to vector<16x128xf32>
      %15 = arith.addf %12, %14 : vector<16x128xf32>
      %c0_14 = arith.constant 0 : index
      %c0_15 = arith.constant 0 : index
      %16 = vector.load %arg6[%c0_14, %c0_15] : memref<16x128xf32, #tpu.memory_space<vmem>>, vector<16x128xf32>
      %17 = arith.addf %15, %16 : vector<16x128xf32>
      %c0_16 = arith.constant 0 : index
      %c0_17 = arith.constant 0 : index
      %18 = vector.load %arg7[%c0_16, %c0_17] : memref<16x128xf32, #tpu.memory_space<vmem>>, vector<16x128xf32>
      tpu.vector_store %arg7[%c0_16, %c0_17], %17 {strides = array<i32>} : memref<16x128xf32, #tpu.memory_space<vmem>>, vector<16x128xf32>,
    } else {
    }
    return
  }
  func.func @transform_0(%arg0: i32, %arg1: i32, %arg2: i32) -> (i32, i32) {
    %c0_i32 = arith.constant 0 : i32
    return %arg0, %arg2 : i32, i32
  }
  func.func @transform_1(%arg0: i32, %arg1: i32, %arg2: i32) -> (i32, i32) {
    %c0_i32 = arith.constant 0 : i32
    return %arg2, %arg1 : i32, i32
  }
  func.func @transform_2(%arg0: i32, %arg1: i32, %arg2: i32) -> (i32, i32) {
    %c0_i32 = arith.constant 0 : i32
    %c0_i32_0 = arith.constant 0 : i32
    return %c0_i32, %arg1 : i32, i32
  }
  func.func @transform_3(%arg0: i32, %arg1: i32, %arg2: i32) -> (i32, i32) {
    %c0_i32 = arith.constant 0 : i32
    return %arg0, %arg1 : i32, i32
  }
  func.func @transform_4(%arg0: i32, %arg1: i32, %arg2: i32) -> (i32, i32) {
    %c0_i32 = arith.constant 0 : i32
    return %arg0, %arg1 : i32, i32
  }
}

module attributes {stable_mosaic.version = 11 : i64} {
  func.func @_linear_kernel(%arg0: i32, %arg1: i32, %arg2: i32, %arg3: memref<16x128xbf16, #tpu.memory_space<vmem>>, %arg4: memref<128x128xbf16, #tpu.memory_space<vmem>>, %arg5: memref<1x128xf32, #tpu.memory_space<vmem>>, %arg6: memref<16x128xbf16, #tpu.memory_space<vmem>>, %arg7: memref<16x128xf32, #tpu.memory_space<vmem>>) attributes {dimension_semantics = [#tpu.dimension_semantics<parallel>, #tpu.dimension_semantics<parallel>, #tpu.dimension_semantics<arbitrary>], iteration_bounds = array<i64: 1, 1, 1>, scalar_prefetch = 0 : i64, scratch_operands = 1 : i64, tpu.core_type = #tpu.core_type<tc>, window_params = [{transform_indices = @transform_0, window_bounds = array<i64: 16, 128>}, {transform_indices = @transform_1, window_bounds = array<i64: 128, 128>}, {transform_indices = @transform_2, window_bounds = array<i64: 1, 128>}, {transform_indices = @transform_3, window_bounds = array<i64: 16, 128>}]} {
    %c0_i32 = arith.constant 0 : i32
    %0 = arith.cmpi eq, %arg2, %c0_i32 : i32
    %1 = arith.extui %0 : i1 to i32
    %c0_i32_0 = arith.constant 0 : i32
    %2 = arith.cmpi ne, %1, %c0_i32_0 : i32
    scf.if %2 {
      %cst_10 = arith.constant 0.000000e+00 : f32
      %12 = vector.broadcast %cst_10 : f32 to vector<16x128xf32>
      %c0_11 = arith.constant 0 : index
      %c0_12 = arith.constant 0 : index
      %13 = vector.load %arg7[%c0_11, %c0_12] : memref<16x128xf32, #tpu.memory_space<vmem>>, vector<16x128xf32>
      tpu.vector_store %arg7[%c0_11, %c0_12], %12 {strides = array<i32>} : memref<16x128xf32, #tpu.memory_space<vmem>>, vector<16x128xf32>,
    } else {
    }
    %c0 = arith.constant 0 : index
    %c0_1 = arith.constant 0 : index
    %3 = vector.load %arg7[%c0, %c0_1] : memref<16x128xf32, #tpu.memory_space<vmem>>, vector<16x128xf32>
    %c0_2 = arith.constant 0 : index
    %c0_3 = arith.constant 0 : index
    %4 = vector.load %arg3[%c0_2, %c0_3] : memref<16x128xbf16, #tpu.memory_space<vmem>>, vector<16x128xbf16>
    %c0_4 = arith.constant 0 : index
    %c0_5 = arith.constant 0 : index
    %5 = vector.load %arg4[%c0_4, %c0_5] : memref<128x128xbf16, #tpu.memory_space<vmem>>, vector<128x128xbf16>
    %cst = arith.constant dense<0.000000e+00> : vector<16x128xf32>
    %6 = tpu.matmul %4, %5, %cst {dimension_numbers = #tpu.dot_dimension_numbers<[1], [0], [0], [1], [0, 0, 1, 1], [], []>} : vector<16x128xbf16>, vector<128x128xbf16>, vector<16x128xf32> -> vector<16x128xf32>
    %7 = arith.addf %3, %6 : vector<16x128xf32>
    %c0_6 = arith.constant 0 : index
    %c0_7 = arith.constant 0 : index
    %8 = vector.load %arg7[%c0_6, %c0_7] : memref<16x128xf32, #tpu.memory_space<vmem>>, vector<16x128xf32>
    tpu.vector_store %arg7[%c0_6, %c0_7], %7 {strides = array<i32>} : memref<16x128xf32, #tpu.memory_space<vmem>>, vector<16x128xf32>,
    %c0_i32_8 = arith.constant 0 : i32
    %9 = arith.cmpi eq, %arg2, %c0_i32_8 : i32
    %10 = arith.extui %9 : i1 to i32
    %c0_i32_9 = arith.constant 0 : i32
    %11 = arith.cmpi ne, %10, %c0_i32_9 : i32
    scf.if %11 {
      %c0_10 = arith.constant 0 : index
      %c0_11 = arith.constant 0 : index
      %12 = vector.load %arg7[%c0_10, %c0_11] : memref<16x128xf32, #tpu.memory_space<vmem>>, vector<16x128xf32>
      %c0_12 = arith.constant 0 : index
      %c0_13 = arith.constant 0 : index
      %13 = vector.load %arg5[%c0_12, %c0_13] : memref<1x128xf32, #tpu.memory_space<vmem>>, vector<1x128xf32>
      %14 = vector.broadcast %13 : vector<1x128xf32> to vector<16x128xf32>
      %15 = arith.addf %12, %14 : vector<16x128xf32>
      %cst_14 = arith.constant 5.000000e-01 : f32
      %16 = vector.broadcast %cst_14 : f32 to vector<16x128xf32>
      %17 = arith.mulf %16, %15 : vector<16x128xf32>
      %cst_15 = arith.constant 4.471500e-02 : f32
      %18 = vector.broadcast %cst_15 : f32 to vector<16x128xf32>
      %19 = arith.mulf %18, %15 : vector<16x128xf32>
      %20 = arith.mulf %19, %15 : vector<16x128xf32>
      %21 = arith.mulf %20, %15 : vector<16x128xf32>
      %22 = arith.addf %15, %21 : vector<16x128xf32>
      %cst_16 = arith.constant 0.797884583 : f32
      %23 = vector.broadcast %cst_16 : f32 to vector<16x128xf32>
      %24 = arith.mulf %23, %22 : vector<16x128xf32>
      %25 = math.tanh %24 : vector<16x128xf32>
      %cst_17 = arith.constant 1.000000e+00 : f32
      %26 = vector.broadcast %cst_17 : f32 to vector<16x128xf32>
      %27 = arith.addf %26, %25 : vector<16x128xf32>
      %28 = arith.mulf %17, %27 : vector<16x128xf32>
      %29 = arith.truncf %28 : vector<16x128xf32> to vector<16x128xbf16>
      %c0_18 = arith.constant 0 : index
      %c0_19 = arith.constant 0 : index
      %30 = vector.load %arg6[%c0_18, %c0_19] : memref<16x128xbf16, #tpu.memory_space<vmem>>, vector<16x128xbf16>
      tpu.vector_store %arg6[%c0_18, %c0_19], %29 {strides = array<i32>} : memref<16x128xbf16, #tpu.memory_space<vmem>>, vector<16x128xbf16>,
    } else {
    }
    return
  }
  func.func @transform_0(%arg0: i32, %arg1: i32, %arg2: i32) -> (i32, i32) {
    %c0_i32 = arith.constant 0 : i32
    return %arg0, %arg2 : i32, i32
  }
  func.func @transform_1(%arg0: i32, %arg1: i32, %arg2: i32) -> (i32, i32) {
    %c0_i32 = arith.constant 0 : i32
    return %arg2, %arg1 : i32, i32
  }
  func.func @transform_2(%arg0: i32, %arg1: i32, %arg2: i32) -> (i32, i32) {
    %c0_i32 = arith.constant 0 : i32
    %c0_i32_0 = arith.constant 0 : i32
    return %c0_i32, %arg1 : i32, i32
  }
  func.func @transform_3(%arg0: i32, %arg1: i32, %arg2: i32) -> (i32, i32) {
    %c0_i32 = arith.constant 0 : i32
    return %arg0, %arg1 : i32, i32
  }
}

module attributes {stable_mosaic.version = 11 : i64} {
  func.func @_linear_kernel(%arg0: i32, %arg1: i32, %arg2: i32, %arg3: memref<16x128xbf16, #tpu.memory_space<vmem>>, %arg4: memref<128x128xbf16, #tpu.memory_space<vmem>>, %arg5: memref<16x128xf32, #tpu.memory_space<vmem>>, %arg6: memref<16x128xf32, #tpu.memory_space<vmem>>) attributes {dimension_semantics = [#tpu.dimension_semantics<parallel>, #tpu.dimension_semantics<parallel>, #tpu.dimension_semantics<arbitrary>], iteration_bounds = array<i64: 1, 1, 1>, scalar_prefetch = 0 : i64, scratch_operands = 1 : i64, tpu.core_type = #tpu.core_type<tc>, window_params = [{transform_indices = @transform_0, window_bounds = array<i64: 16, 128>}, {transform_indices = @transform_1, window_bounds = array<i64: 128, 128>}, {transform_indices = @transform_2, window_bounds = array<i64: 16, 128>}]} {
    %c0_i32 = arith.constant 0 : i32
    %0 = arith.cmpi eq, %arg2, %c0_i32 : i32
    %1 = arith.extui %0 : i1 to i32
    %c0_i32_0 = arith.constant 0 : i32
    %2 = arith.cmpi ne, %1, %c0_i32_0 : i32
    scf.if %2 {
      %cst_10 = arith.constant 0.000000e+00 : f32
      %12 = vector.broadcast %cst_10 : f32 to vector<16x128xf32>
      %c0_11 = arith.constant 0 : index
      %c0_12 = arith.constant 0 : index
      %13 = vector.load %arg6[%c0_11, %c0_12] : memref<16x128xf32, #tpu.memory_space<vmem>>, vector<16x128xf32>
      tpu.vector_store %arg6[%c0_11, %c0_12], %12 {strides = array<i32>} : memref<16x128xf32, #tpu.memory_space<vmem>>, vector<16x128xf32>,
    } else {
    }
    %c0 = arith.constant 0 : index
    %c0_1 = arith.constant 0 : index
    %3 = vector.load %arg6[%c0, %c0_1] : memref<16x128xf32, #tpu.memory_space<vmem>>, vector<16x128xf32>
    %c0_2 = arith.constant 0 : index
    %c0_3 = arith.constant 0 : index
    %4 = vector.load %arg3[%c0_2, %c0_3] : memref<16x128xbf16, #tpu.memory_space<vmem>>, vector<16x128xbf16>
    %c0_4 = arith.constant 0 : index
    %c0_5 = arith.constant 0 : index
    %5 = vector.load %arg4[%c0_4, %c0_5] : memref<128x128xbf16, #tpu.memory_space<vmem>>, vector<128x128xbf16>
    %cst = arith.constant dense<0.000000e+00> : vector<16x128xf32>
    %6 = tpu.matmul %4, %5, %cst {dimension_numbers = #tpu.dot_dimension_numbers<[1], [0], [0], [1], [0, 0, 1, 1], [], []>} : vector<16x128xbf16>, vector<128x128xbf16>, vector<16x128xf32> -> vector<16x128xf32>
    %7 = arith.addf %3, %6 : vector<16x128xf32>
    %c0_6 = arith.constant 0 : index
    %c0_7 = arith.constant 0 : index
    %8 = vector.load %arg6[%c0_6, %c0_7] : memref<16x128xf32, #tpu.memory_space<vmem>>, vector<16x128xf32>
    tpu.vector_store %arg6[%c0_6, %c0_7], %7 {strides = array<i32>} : memref<16x128xf32, #tpu.memory_space<vmem>>, vector<16x128xf32>,
    %c0_i32_8 = arith.constant 0 : i32
    %9 = arith.cmpi eq, %arg2, %c0_i32_8 : i32
    %10 = arith.extui %9 : i1 to i32
    %c0_i32_9 = arith.constant 0 : i32
    %11 = arith.cmpi ne, %10, %c0_i32_9 : i32
    scf.if %11 {
      %c0_10 = arith.constant 0 : index
      %c0_11 = arith.constant 0 : index
      %12 = vector.load %arg6[%c0_10, %c0_11] : memref<16x128xf32, #tpu.memory_space<vmem>>, vector<16x128xf32>
      %c0_12 = arith.constant 0 : index
      %c0_13 = arith.constant 0 : index
      %13 = vector.load %arg5[%c0_12, %c0_13] : memref<16x128xf32, #tpu.memory_space<vmem>>, vector<16x128xf32>
      tpu.vector_store %arg5[%c0_12, %c0_13], %12 {strides = array<i32>} : memref<16x128xf32, #tpu.memory_space<vmem>>, vector<16x128xf32>,
    } else {
    }
    return
  }
  func.func @transform_0(%arg0: i32, %arg1: i32, %arg2: i32) -> (i32, i32) {
    %c0_i32 = arith.constant 0 : i32
    return %arg0, %arg2 : i32, i32
  }
  func.func @transform_1(%arg0: i32, %arg1: i32, %arg2: i32) -> (i32, i32) {
    %c0_i32 = arith.constant 0 : i32
    return %arg2, %arg1 : i32, i32
  }
  func.func @transform_2(%arg0: i32, %arg1: i32, %arg2: i32) -> (i32, i32) {
    %c0_i32 = arith.constant 0 : i32
    return %arg0, %arg1 : i32, i32
  }
}

</mosaic_0001>

<llo_original>
// kernel: gpt_forward.16
$region0: #{gpt_forward.16}
  #allocation0 [shape = 'u32[]', space=smem, size = 0x4, offset = 0x4, fixed_abs, tag = 'smem constant byte address 0x4 - core index']
  #allocation1 [shape = 'u32[144,128]{1,0:T(1,128)}', space=vmem, size = 0x12000, scoped, tag = 'internal scratch']
  %s0 = inlined_call_operand.vmem [shape: f32[16,32], index: 0, kind: input, shape index: {}]
  %s1 = inlined_call_operand.vmem [shape: f32[1,32], index: 1, kind: input, shape index: {}]
  %s2 = inlined_call_operand.vmem [shape: f32[1,32], index: 2, kind: input, shape index: {}]
  %s3 = inlined_call_operand.vmem [shape: bf16[16,32], index: 3, kind: output, shape index: {}]
  %s4 = sld [smem:[#allocation0]]
  $region22: #{gpt_forward.16} parent=0
    _
  %s6 = ssub.s32 1, %s4
  %s7 = scalar_select 0, %s6, %s4
  // Predicated region
  $region2: #{gpt_forward.16} parent=0 // pred_check
    _
  $region3: #{gpt_forward.16} parent=0 // pred_check_branch
    %9 = sbr.rel (0) target = $region5
  $region4: #{gpt_forward.16} parent=0 // pred_region
    _
  $region5: #{gpt_forward.16} parent=0 // pred_fallthru
    _
  // Predicated region
  $region6: #{gpt_forward.16} parent=0 // pred_check
    _
  $region7: #{gpt_forward.16} parent=0 // pred_check_branch
    %11 = sbr.rel (0) target = $region9
  $region8: #{gpt_forward.16} parent=0 // pred_region
    _
  $region9: #{gpt_forward.16} parent=0 // pred_fallthru
    _
  // Predicated region
  $region10: #{gpt_forward.16} parent=0 // pred_check
    _
  $region11: #{gpt_forward.16} parent=0 // pred_check_branch
    %13 = sbr.rel (0) target = $region13
  $region12: #{gpt_forward.16} parent=0 // pred_region
    _
  $region13: #{gpt_forward.16} parent=0 // pred_fallthru
    _
  %v14 = vld [vmem:[%s0] sm:$0xff]
  %v15 = vld [vmem:[%s0 + $0x8] sm:$0xff]
  %vm16 = vcmask 261120
  %v17 = vsel %vm16, %v14, 0.0
  %18 = vadd.xlane.f32.xlu0 %v17
  %v19 = vpop.xlane.xlu0 %18
  %v20 = vsel %vm16, %v15, 0.0
  %21 = vadd.xlane.f32.xlu0 %v20
  %v22 = vpop.xlane.xlu0 %21
  %v23 = vrcp.pop 32.0
  %v24 = vmul.f32 %v19, %v23
  %v25 = vmul.f32 %v22, %v23
  %v26 = vsub.f32 %v14, %v24
  %v27 = vsub.f32 %v15, %v25
  %v28 = vmul.f32 %v26, %v26
  %v29 = vmul.f32 %v27, %v27
  %v30 = vsel %vm16, %v28, 0.0
  %31 = vadd.xlane.f32.xlu0 %v30
  %v32 = vpop.xlane.xlu0 %31
  %v33 = vsel %vm16, %v29, 0.0
  %34 = vadd.xlane.f32.xlu0 %v33
  %v35 = vpop.xlane.xlu0 %34
  %v36 = vmul.f32 %v32, %v23
  %v37 = vmul.f32 %v35, %v23
  %v38 = vadd.f32 %v36, 1e-05
  %v39 = vadd.f32 %v37, 1e-05
  %v40 = vrsqrt.pop %v38
  %v41 = vrsqrt.pop %v39
  %v42 = vmul.f32 %v26, %v40
  %v43 = vmul.f32 %v27, %v41
  %v44 = vld [vmem:[%s1] sm:$0x1]
  %v46 = vlaneseq
  %v47 = vshrl.u32 %v46, 7
  %v48 = vsub.s32 0, %v47
  %v49 = vrot.slane %v44, %v48
  %v51 = vmul.f32 %v42, %v49
  %v52 = vmul.f32 %v43, %v49
  %v53 = vld [vmem:[%s2] sm:$0x1]
  %v55 = vlaneseq
  %v56 = vshrl.u32 %v55, 7
  %v57 = vsub.s32 0, %v56
  %v58 = vrot.slane %v53, %v57
  %v60 = vadd.f32 %v51, %v58
  %v61 = vadd.f32 %v52, %v58
  %v62 = vpack.c.bf16 %v61, %v60
  %v64 = vunpack.c.l.b16 %v62
  %v65 = vunpack.c.h.b16 %v62
  %v66 = vpack.c.b16 %v64, %v64
  %v67 = vpack.c.b16 %v65, %v65
  %vm70 = vcmask 257024
  %71 = vst.msk [vmem:[%s3] sm:$0xf] %vm70, %v66
  %72 = vst.msk [vmem:[%s3 + $0x4] sm:$0xf] %vm70, %v67
  // Predicated region
  $region14: #{gpt_forward.16} parent=0 // pred_check
    _
  $region15: #{gpt_forward.16} parent=0 // pred_check_branch
    %74 = sbr.rel (0) target = $region17
  $region16: #{gpt_forward.16} parent=0 // pred_region
    _
  $region17: #{gpt_forward.16} parent=0 // pred_fallthru
    _
  // Predicated region
  $region18: #{gpt_forward.16} parent=0 // pred_check
    _
  $region19: #{gpt_forward.16} parent=0 // pred_check_branch
    %76 = sbr.rel (0) target = $region21
  $region20: #{gpt_forward.16} parent=0 // pred_region
    _
  $region21: #{gpt_forward.16} parent=0 // pred_fallthru
    _

// kernel: gpt_forward.17
$region0: #{gpt_forward.17}
  #allocation0 [shape = 'u32[]', space=smem, size = 0x4, offset = 0x4, fixed_abs, tag = 'smem constant byte address 0x4 - core index']
  #allocation1 [shape = 'u32[144,128]{1,0:T(1,128)}', space=vmem, size = 0x12000, scoped, tag = 'internal scratch']
  #allocation2 [shape = 'f32[16,128]{1,0:T(8,128)}', space=vmem, size = 0x2000, scoped, tag = 'scratch operand']
  %s0 = inlined_call_operand.vmem [shape: bf16[16,128], index: 0, kind: input, shape index: {}]
  %s1 = inlined_call_operand.vmem [shape: bf16[128,128], index: 1, kind: input, shape index: {}]
  %s2 = inlined_call_operand.vmem [shape: f32[1,128], index: 2, kind: input, shape index: {}]
  %s3 = inlined_call_operand.vmem [shape: bf16[16,128], index: 3, kind: output, shape index: {}]
  %s4 = sld [smem:[#allocation0]]
  $region30: #{gpt_forward.17} parent=0
    _
  %s6 = ssub.s32 1, %s4
  %s7 = scalar_select 0, %s6, %s4
  // Predicated region
  $region2: #{gpt_forward.17} parent=0 // pred_check
    _
  $region3: #{gpt_forward.17} parent=0 // pred_check_branch
    %9 = sbr.rel (0) target = $region5
  $region4: #{gpt_forward.17} parent=0 // pred_region
    _
  $region5: #{gpt_forward.17} parent=0 // pred_fallthru
    _
  // Predicated region
  $region6: #{gpt_forward.17} parent=0 // pred_check
    _
  $region7: #{gpt_forward.17} parent=0 // pred_check_branch
    %11 = sbr.rel (0) target = $region9
  $region8: #{gpt_forward.17} parent=0 // pred_region
    _
  $region9: #{gpt_forward.17} parent=0 // pred_fallthru
    _
  // Predicated region
  $region10: #{gpt_forward.17} parent=0 // pred_check
    _
  $region11: #{gpt_forward.17} parent=0 // pred_check_branch
    %13 = sbr.rel (0) target = $region13
  $region12: #{gpt_forward.17} parent=0 // pred_region
    _
  $region13: #{gpt_forward.17} parent=0 // pred_fallthru
    _
  %p15 = scmp.eq.s32.totalorder 0, 0
  // Predicated region
  $region14: #{gpt_forward.17} parent=0 // pred_check
    %p16 = pneg %p15
  $region15: #{gpt_forward.17} parent=0 // pred_check_branch
    %18 = sbr.rel (%p16) target = $region17
  $region16: #{gpt_forward.17} parent=0 // pred_region
    %19 = vst [vmem:[#allocation2] sm:$0xff] 0.0
    %20 = vst [vmem:[#allocation2 + $0x8] sm:$0xff] 0.0
  $region17: #{gpt_forward.17} parent=0 // pred_fallthru
    _
  %v21 = vld [vmem:[#allocation2] sm:$0xff]
  %v22 = vld [vmem:[#allocation2 + $0x8] sm:$0xff]
  %v23 = vld [vmem:[%s0] sm:$0xf]
  %v24 = vld [vmem:[%s0 + $0x4] sm:$0xf]
  %v25 = vld [vmem:[%s1] sm:$0xf]
  %v26 = vld [vmem:[%s1 + $0x4] sm:$0xf]
  %v27 = vld [vmem:[%s1 + $0x8] sm:$0xf]
  %v28 = vld [vmem:[%s1 + $0xc] sm:$0xf]
  %v29 = vld [vmem:[%s1 + $0x10] sm:$0xf]
  %v30 = vld [vmem:[%s1 + $0x14] sm:$0xf]
  %v31 = vld [vmem:[%s1 + $0x18] sm:$0xf]
  %v32 = vld [vmem:[%s1 + $0x1c] sm:$0xf]
  %v33 = vld [vmem:[%s1 + $0x20] sm:$0xf]
  %v34 = vld [vmem:[%s1 + $0x24] sm:$0xf]
  %v35 = vld [vmem:[%s1 + $0x28] sm:$0xf]
  %v36 = vld [vmem:[%s1 + $0x2c] sm:$0xf]
  %v37 = vld [vmem:[%s1 + $0x30] sm:$0xf]
  %v38 = vld [vmem:[%s1 + $0x34] sm:$0xf]
  %v39 = vld [vmem:[%s1 + $0x38] sm:$0xf]
  %v40 = vld [vmem:[%s1 + $0x3c] sm:$0xf]
  %v43 = vunpack.c.l.b16 %v23
  %v44 = vunpack.c.l.b16 %v24
  %v45 = vpack.c.b16 %v44, %v43
  %v63 = vunpack.c.l.b16 %v25
  %v64 = vunpack.c.l.b16 %v26
  %v65 = vunpack.c.l.b16 %v27
  %v66 = vunpack.c.l.b16 %v28
  %v67 = vunpack.c.l.b16 %v29
  %v68 = vunpack.c.l.b16 %v30
  %v69 = vunpack.c.l.b16 %v31
  %v70 = vunpack.c.l.b16 %v32
  %v71 = vunpack.c.l.b16 %v33
  %v72 = vunpack.c.l.b16 %v34
  %v73 = vunpack.c.l.b16 %v35
  %v74 = vunpack.c.l.b16 %v36
  %v75 = vunpack.c.l.b16 %v37
  %v76 = vunpack.c.l.b16 %v38
  %v77 = vunpack.c.l.b16 %v39
  %v78 = vunpack.c.l.b16 %v40
  %v79 = vpack.c.b16 %v64, %v63
  %v80 = vpack.c.b16 %v66, %v65
  %v81 = vpack.c.b16 %v68, %v67
  %v82 = vpack.c.b16 %v70, %v69
  %v83 = vpack.c.b16 %v72, %v71
  %v84 = vpack.c.b16 %v74, %v73
  %v85 = vpack.c.b16 %v76, %v75
  %v86 = vpack.c.b16 %v78, %v77
  %95 = vmatprep.subr.bf16.mxu0 0
  %96 = vmatpush1.bf16.msra.mxu0 %v79
  %97 = vmatprep.subr.bf16.mxu0 0
  %98 = vmatpush1.bf16.msra.mxu0 %v80
  %99 = vmatprep.subr.bf16.mxu0 0
  %100 = vmatpush1.bf16.msra.mxu0 %v81
  %101 = vmatprep.subr.bf16.mxu0 0
  %102 = vmatpush1.bf16.msra.mxu0 %v82
  %103 = vmatprep.subr.bf16.mxu0 0
  %104 = vmatpush1.bf16.msra.mxu0 %v83
  %105 = vmatprep.subr.bf16.mxu0 0
  %106 = vmatpush1.bf16.msra.mxu0 %v84
  %107 = vmatprep.subr.bf16.mxu0 0
  %108 = vmatpush1.bf16.msra.mxu0 %v85
  %109 = vmatprep.subr.bf16.mxu0 0
  %110 = vmatpush1.bf16.msra.mxu0 %v86
  %111 = vmatprep.subr.bf16.mxu0 0
  %112 = vmatpush1.bf16.msra.mxu0 0
  %113 = vmatprep.subr.bf16.mxu0 0
  %114 = vmatpush1.bf16.msra.mxu0 0
  %115 = vmatprep.subr.bf16.mxu0 0
  %116 = vmatpush1.bf16.msra.mxu0 0
  %117 = vmatprep.subr.bf16.mxu0 0
  %118 = vmatpush1.bf16.msra.mxu0 0
  %119 = vmatprep.subr.bf16.mxu0 0
  %120 = vmatpush1.bf16.msra.mxu0 0
  %121 = vmatprep.subr.bf16.mxu0 0
  %122 = vmatpush1.bf16.msra.mxu0 0
  %123 = vmatprep.subr.bf16.mxu0 0
  %124 = vmatpush1.bf16.msra.mxu0 0
  %125 = vmatprep.subr.bf16.mxu0 0
  %126 = vmatpush1.bf16.msra.mxu0 0
  %127 = vmatprep.mubr.bf16.mxu0 0
  %128 = vmatmul.mubr.bf16.gmra.mrb[0].mxu0 %v45
  %v129 = vpop.f32.mrb[0].mxu0
  %v130 = vadd.f32 0.0, %v129
  %v131 = vpop.f32.mrb[0].mxu0
  %v132 = vpop.f32.mrb[0].mxu0
  %v133 = vadd.f32 0.0, %v132
  %v134 = vpop.f32.mrb[0].mxu0
  %135 = vdwg.mxu0
  %v136 = vadd.f32 %v21, %v130
  %v137 = vadd.f32 %v22, %v133
  %138 = vst [vmem:[#allocation2] sm:$0xff] %v136
  %139 = vst [vmem:[#allocation2 + $0x8] sm:$0xff] %v137
  // Predicated region
  $region18: #{gpt_forward.17} parent=0 // pred_check
    %p140 = pneg %p15
  $region19: #{gpt_forward.17} parent=0 // pred_check_branch
    %142 = sbr.rel (%p140) target = $region21
  $region20: #{gpt_forward.17} parent=0 // pred_region
    %v143 = vld [vmem:[#allocation2] sm:$0xff]
    %v144 = vld [vmem:[#allocation2 + $0x8] sm:$0xff]
    %v145 = vld [vmem:[%s2] sm:$0x1]
    %v147 = vlaneseq
    %v148 = vshrl.u32 %v147, 7
    %v149 = vsub.s32 0, %v148
    %v150 = vrot.slane %v145, %v149
    %v152 = vadd.f32 %v143, %v150
    %v153 = vadd.f32 %v144, %v150
    %v154 = vpack.c.bf16 %v153, %v152
    %v156 = vunpack.c.l.b16 %v154
    %v157 = vunpack.c.h.b16 %v154
    %v158 = vpack.c.b16 %v156, %v156
    %v159 = vpack.c.b16 %v157, %v157
    %162 = vst [vmem:[%s3] sm:$0xf] %v158
    %163 = vst [vmem:[%s3 + $0x4] sm:$0xf] %v159
  $region21: #{gpt_forward.17} parent=0 // pred_fallthru
    _
  // Predicated region
  $region22: #{gpt_forward.17} parent=0 // pred_check
    _
  $region23: #{gpt_forward.17} parent=0 // pred_check_branch
    %165 = sbr.rel (0) target = $region25
  $region24: #{gpt_forward.17} parent=0 // pred_region
    _
  $region25: #{gpt_forward.17} parent=0 // pred_fallthru
    _
  // Predicated region
  $region26: #{gpt_forward.17} parent=0 // pred_check
    _
  $region27: #{gpt_forward.17} parent=0 // pred_check_branch
    %167 = sbr.rel (0) target = $region29
  $region28: #{gpt_forward.17} parent=0 // pred_region
    _
  $region29: #{gpt_forward.17} parent=0 // pred_fallthru
    _

// kernel: gpt_forward.19
$region0: #{gpt_forward.19}
  #allocation0 [shape = 'u32[]', space=smem, size = 0x4, offset = 0x4, fixed_abs, tag = 'smem constant byte address 0x4 - core index']
  #allocation1 [shape = 'u32[144,128]{1,0:T(1,128)}', space=vmem, size = 0x12000, scoped, tag = 'internal scratch']
  #allocation2 [shape = 'f32[16,128]{1,0:T(8,128)}', space=vmem, size = 0x2000, scoped, tag = 'scratch operand']
  %s0 = inlined_call_operand.vmem [shape: bf16[16,128], index: 0, kind: input, shape index: {}]
  %s1 = inlined_call_operand.vmem [shape: bf16[128,128], index: 1, kind: input, shape index: {}]
  %s2 = inlined_call_operand.vmem [shape: f32[1,128], index: 2, kind: input, shape index: {}]
  %s3 = inlined_call_operand.vmem [shape: f32[16,128], index: 3, kind: input, shape index: {}]
  %s4 = inlined_call_operand.vmem [shape: f32[16,128], index: 4, kind: output, shape index: {}]
  %s5 = sld [smem:[#allocation0]]
  $region34: #{gpt_forward.19} parent=0
    _
  %s7 = ssub.s32 1, %s5
  %s8 = scalar_select 0, %s7, %s5
  // Predicated region
  $region2: #{gpt_forward.19} parent=0 // pred_check
    _
  $region3: #{gpt_forward.19} parent=0 // pred_check_branch
    %10 = sbr.rel (0) target = $region5
  $region4: #{gpt_forward.19} parent=0 // pred_region
    _
  $region5: #{gpt_forward.19} parent=0 // pred_fallthru
    _
  // Predicated region
  $region6: #{gpt_forward.19} parent=0 // pred_check
    _
  $region7: #{gpt_forward.19} parent=0 // pred_check_branch
    %12 = sbr.rel (0) target = $region9
  $region8: #{gpt_forward.19} parent=0 // pred_region
    _
  $region9: #{gpt_forward.19} parent=0 // pred_fallthru
    _
  // Predicated region
  $region10: #{gpt_forward.19} parent=0 // pred_check
    _
  $region11: #{gpt_forward.19} parent=0 // pred_check_branch
    %14 = sbr.rel (0) target = $region13
  $region12: #{gpt_forward.19} parent=0 // pred_region
    _
  $region13: #{gpt_forward.19} parent=0 // pred_fallthru
    _
  // Predicated region
  $region14: #{gpt_forward.19} parent=0 // pred_check
    _
  $region15: #{gpt_forward.19} parent=0 // pred_check_branch
    %16 = sbr.rel (0) target = $region17
  $region16: #{gpt_forward.19} parent=0 // pred_region
    _
  $region17: #{gpt_forward.19} parent=0 // pred_fallthru
    _
  %p18 = scmp.eq.s32.totalorder 0, 0
  // Predicated region
  $region18: #{gpt_forward.19} parent=0 // pred_check
    %p19 = pneg %p18
  $region19: #{gpt_forward.19} parent=0 // pred_check_branch
    %21 = sbr.rel (%p19) target = $region21
  $region20: #{gpt_forward.19} parent=0 // pred_region
    %22 = vst [vmem:[#allocation2] sm:$0xff] 0.0
    %23 = vst [vmem:[#allocation2 + $0x8] sm:$0xff] 0.0
  $region21: #{gpt_forward.19} parent=0 // pred_fallthru
    _
  %v24 = vld [vmem:[#allocation2] sm:$0xff]
  %v25 = vld [vmem:[#allocation2 + $0x8] sm:$0xff]
  %v26 = vld [vmem:[%s0] sm:$0xf]
  %v27 = vld [vmem:[%s0 + $0x4] sm:$0xf]
  %v28 = vld [vmem:[%s1] sm:$0xf]
  %v29 = vld [vmem:[%s1 + $0x4] sm:$0xf]
  %v30 = vld [vmem:[%s1 + $0x8] sm:$0xf]
  %v31 = vld [vmem:[%s1 + $0xc] sm:$0xf]
  %v32 = vld [vmem:[%s1 + $0x10] sm:$0xf]
  %v33 = vld [vmem:[%s1 + $0x14] sm:$0xf]
  %v34 = vld [vmem:[%s1 + $0x18] sm:$0xf]
  %v35 = vld [vmem:[%s1 + $0x1c] sm:$0xf]
  %v36 = vld [vmem:[%s1 + $0x20] sm:$0xf]
  %v37 = vld [vmem:[%s1 + $0x24] sm:$0xf]
  %v38 = vld [vmem:[%s1 + $0x28] sm:$0xf]
  %v39 = vld [vmem:[%s1 + $0x2c] sm:$0xf]
  %v40 = vld [vmem:[%s1 + $0x30] sm:$0xf]
  %v41 = vld [vmem:[%s1 + $0x34] sm:$0xf]
  %v42 = vld [vmem:[%s1 + $0x38] sm:$0xf]
  %v43 = vld [vmem:[%s1 + $0x3c] sm:$0xf]
  %v46 = vunpack.c.l.b16 %v26
  %v47 = vunpack.c.l.b16 %v27
  %v48 = vpack.c.b16 %v47, %v46
  %v66 = vunpack.c.l.b16 %v28
  %v67 = vunpack.c.l.b16 %v29
  %v68 = vunpack.c.l.b16 %v30
  %v69 = vunpack.c.l.b16 %v31
  %v70 = vunpack.c.l.b16 %v32
  %v71 = vunpack.c.l.b16 %v33
  %v72 = vunpack.c.l.b16 %v34
  %v73 = vunpack.c.l.b16 %v35
  %v74 = vunpack.c.l.b16 %v36
  %v75 = vunpack.c.l.b16 %v37
  %v76 = vunpack.c.l.b16 %v38
  %v77 = vunpack.c.l.b16 %v39
  %v78 = vunpack.c.l.b16 %v40
  %v79 = vunpack.c.l.b16 %v41
  %v80 = vunpack.c.l.b16 %v42
  %v81 = vunpack.c.l.b16 %v43
  %v82 = vpack.c.b16 %v67, %v66
  %v83 = vpack.c.b16 %v69, %v68
  %v84 = vpack.c.b16 %v71, %v70
  %v85 = vpack.c.b16 %v73, %v72
  %v86 = vpack.c.b16 %v75, %v74
  %v87 = vpack.c.b16 %v77, %v76
  %v88 = vpack.c.b16 %v79, %v78
  %v89 = vpack.c.b16 %v81, %v80
  %98 = vmatprep.subr.bf16.mxu0 0
  %99 = vmatpush1.bf16.msra.mxu0 %v82
  %100 = vmatprep.subr.bf16.mxu0 0
  %101 = vmatpush1.bf16.msra.mxu0 %v83
  %102 = vmatprep.subr.bf16.mxu0 0
  %103 = vmatpush1.bf16.msra.mxu0 %v84
  %104 = vmatprep.subr.bf16.mxu0 0
  %105 = vmatpush1.bf16.msra.mxu0 %v85
  %106 = vmatprep.subr.bf16.mxu0 0
  %107 = vmatpush1.bf16.msra.mxu0 %v86
  %108 = vmatprep.subr.bf16.mxu0 0
  %109 = vmatpush1.bf16.msra.mxu0 %v87
  %110 = vmatprep.subr.bf16.mxu0 0
  %111 = vmatpush1.bf16.msra.mxu0 %v88
  %112 = vmatprep.subr.bf16.mxu0 0
  %113 = vmatpush1.bf16.msra.mxu0 %v89
  %114 = vmatprep.subr.bf16.mxu0 0
  %115 = vmatpush1.bf16.msra.mxu0 0
  %116 = vmatprep.subr.bf16.mxu0 0
  %117 = vmatpush1.bf16.msra.mxu0 0
  %118 = vmatprep.subr.bf16.mxu0 0
  %119 = vmatpush1.bf16.msra.mxu0 0
  %120 = vmatprep.subr.bf16.mxu0 0
  %121 = vmatpush1.bf16.msra.mxu0 0
  %122 = vmatprep.subr.bf16.mxu0 0
  %123 = vmatpush1.bf16.msra.mxu0 0
  %124 = vmatprep.subr.bf16.mxu0 0
  %125 = vmatpush1.bf16.msra.mxu0 0
  %126 = vmatprep.subr.bf16.mxu0 0
  %127 = vmatpush1.bf16.msra.mxu0 0
  %128 = vmatprep.subr.bf16.mxu0 0
  %129 = vmatpush1.bf16.msra.mxu0 0
  %130 = vmatprep.mubr.bf16.mxu0 0
  %131 = vmatmul.mubr.bf16.gmra.mrb[0].mxu0 %v48
  %v132 = vpop.f32.mrb[0].mxu0
  %v133 = vadd.f32 0.0, %v132
  %v134 = vpop.f32.mrb[0].mxu0
  %v135 = vpop.f32.mrb[0].mxu0
  %v136 = vadd.f32 0.0, %v135
  %v137 = vpop.f32.mrb[0].mxu0
  %138 = vdwg.mxu0
  %v139 = vadd.f32 %v24, %v133
  %v140 = vadd.f32 %v25, %v136
  %141 = vst [vmem:[#allocation2] sm:$0xff] %v139
  %142 = vst [vmem:[#allocation2 + $0x8] sm:$0xff] %v140
  // Predicated region
  $region22: #{gpt_forward.19} parent=0 // pred_check
    %p143 = pneg %p18
  $region23: #{gpt_forward.19} parent=0 // pred_check_branch
    %145 = sbr.rel (%p143) target = $region25
  $region24: #{gpt_forward.19} parent=0 // pred_region
    %v146 = vld [vmem:[#allocation2] sm:$0xff]
    %v147 = vld [vmem:[#allocation2 + $0x8] sm:$0xff]
    %v148 = vld [vmem:[%s2] sm:$0x1]
    %v150 = vlaneseq
    %v151 = vshrl.u32 %v150, 7
    %v152 = vsub.s32 0, %v151
    %v153 = vrot.slane %v148, %v152
    %v155 = vadd.f32 %v146, %v153
    %v156 = vadd.f32 %v147, %v153
    %v157 = vld [vmem:[%s3] sm:$0xff]
    %v158 = vld [vmem:[%s3 + $0x8] sm:$0xff]
    %v159 = vadd.f32 %v155, %v157
    %v160 = vadd.f32 %v156, %v158
    %161 = vst [vmem:[%s4] sm:$0xff] %v159
    %162 = vst [vmem:[%s4 + $0x8] sm:$0xff] %v160
  $region25: #{gpt_forward.19} parent=0 // pred_fallthru
    _
  // Predicated region
  $region26: #{gpt_forward.19} parent=0 // pred_check
    _
  $region27: #{gpt_forward.19} parent=0 // pred_check_branch
    %164 = sbr.rel (0) target = $region29
  $region28: #{gpt_forward.19} parent=0 // pred_region
    _
  $region29: #{gpt_forward.19} parent=0 // pred_fallthru
    _
  // Predicated region
  $region30: #{gpt_forward.19} parent=0 // pred_check
    _
  $region31: #{gpt_forward.19} parent=0 // pred_check_branch
    %166 = sbr.rel (0) target = $region33
  $region32: #{gpt_forward.19} parent=0 // pred_region
    _
  $region33: #{gpt_forward.19} parent=0 // pred_fallthru
    _

// kernel: gpt_forward.18
$region0: #{gpt_forward.18}
  #allocation0 [shape = 'u32[]', space=smem, size = 0x4, offset = 0x4, fixed_abs, tag = 'smem constant byte address 0x4 - core index']
  #allocation1 [shape = 'u32[144,128]{1,0:T(1,128)}', space=vmem, size = 0x12000, scoped, tag = 'internal scratch']
  #allocation2 [shape = 'f32[1,8,1]{2,1,0:T(8,128)}', space=vmem, size = 0x1000, scoped, tag = 'scratch operand']
  #allocation3 [shape = 'f32[1,8,1]{2,1,0:T(8,128)}', space=vmem, size = 0x1000, scoped, tag = 'scratch operand']
  #allocation4 [shape = 'f32[1,8,8]{2,1,0:T(8,128)}', space=vmem, size = 0x1000, scoped, tag = 'scratch operand']
  %s0 = inlined_call_operand.vmem [shape: bf16[8,8,8], index: 0, kind: input, shape index: {}]
  %s1 = inlined_call_operand.vmem [shape: bf16[8,8,8], index: 1, kind: input, shape index: {}]
  %s2 = inlined_call_operand.vmem [shape: bf16[8,8,8], index: 2, kind: input, shape index: {}]
  %s3 = inlined_call_operand.vmem [shape: bf16[8,8,8], index: 3, kind: output, shape index: {}]
  %s4 = sld [smem:[#allocation0]]
  $region57: #{gpt_forward.18} parent=0
    _
  %s6 = ssub.s32 1, %s4
  %s7 = scalar_select 0, %s6, %s4
  loop: start=0, step=1, limit=10
  $region2: #{gpt_forward.18} parent=0 // loop_pre_header
    _
  $region3: #{gpt_forward.18} parent=0 // loop_header
    %s9 = sphi 0, %s13
    %p10 = scmp.ge.s32.totalorder %s9, 10
    %s16 = sphi 0, %s35
    %s17 = sphi 0, %s31
    %s18 = sphi 0, %s27
    %s19 = sphi 0, %s16
    %s20 = sphi 0, %s17
    %s21 = sphi 0, %s18
    %s22 = sphi 0, %s19
    %s23 = sphi 0, %s20
    %s24 = sphi 0, %s21
    %s40 = sphi 0, %s42
    %s43 = sphi 0, %s40
    %s44 = sphi 0, %s43
    %s60 = sphi 0, %s44
    %s68 = sphi 0, %s70
    %s71 = sphi 0, %s68
    %s72 = sphi 0, %s71
    %s88 = sphi 0, %s72
    %s96 = sphi 0, %s98
    %s99 = sphi 0, %s96
    %s100 = sphi 0, %s99
    %s116 = sphi 0, %s100
    %s124 = sphi 0, %s126
    %s127 = sphi 0, %s124
    %s128 = sphi 0, %s127
    %s144 = sphi 0, %s128
  $region4: #{gpt_forward.18} parent=0 // loop_header_branch
    %12 = sbr.rel (%p10) target = $region8
  $region5: #{gpt_forward.18} parent=0 // loop_body
    %s14 = ssub.s32 %s9, 1
    %s15 = ssub.s32 %s9, 2
    %s25 = sadd.s32 1, %s18
    %p26 = scmp.ge.s32.totalorder %s25, 1
    %s27 = scalar_select %p26, 0, %s25
    %s28 = sadd.s32 1, %s17
    %s29 = scalar_select %p26, %s28, %s17
    %p30 = scmp.ge.s32.totalorder %s29, 1
    %s31 = scalar_select %p30, 0, %s29
    %s32 = sadd.s32 1, %s16
    %s33 = scalar_select %p30, %s32, %s16
    %p34 = scmp.ge.s32.totalorder %s33, 8
    %s35 = scalar_select %p34, 0, %s33
    %s36 = ssub.s32 %s16, %s35
    %s37 = ssub.s32 %s17, %s31
    %s38 = sor.u32 %s36, %s37
    %p39 = scmp.eq.s32.totalorder %s38, 0
    %s41 = sadd.s32 %s40, 1
    %s42 = scalar_select %p39, %s40, %s41
    %p45 = pneg %p39
    %p46 = scmp.eq.s32.totalorder %s9, 7
    %p47 = por %p45, %p46
    %p48 = scmp.ne.s32.totalorder %s40, %s43
    %p49 = scmp.eq.s32.totalorder %s9, 0
    %p50 = por %p48, %p49
    %p51 = scmp.ne.s32.totalorder %s40, %s43
    %p52 = scmp.eq.s32.totalorder %s14, 7
    %p53 = por %p51, %p52
    %p54 = scmp.ne.s32.totalorder %s43, %s44
    %p55 = scmp.eq.s32.totalorder %s14, 0
    %p56 = por %p54, %p55
    %p57 = scmp.ne.s32.totalorder %s43, %s44
    %p58 = scmp.eq.s32.totalorder %s15, 7
    %p59 = por %p57, %p58
    %p61 = scmp.ne.s32.totalorder %s44, %s60
    %p62 = scmp.eq.s32.totalorder %s15, 0
    %p63 = por %p61, %p62
    %s64 = ssub.s32 %s16, %s35
    %s65 = ssub.s32 %s18, %s27
    %s66 = sor.u32 %s64, %s65
    %p67 = scmp.eq.s32.totalorder %s66, 0
    %s69 = sadd.s32 %s68, 1
    %s70 = scalar_select %p67, %s68, %s69
    %p73 = pneg %p67
    %p74 = scmp.eq.s32.totalorder %s9, 7
    %p75 = por %p73, %p74
    %p76 = scmp.ne.s32.totalorder %s68, %s71
    %p77 = scmp.eq.s32.totalorder %s9, 0
    %p78 = por %p76, %p77
    %p79 = scmp.ne.s32.totalorder %s68, %s71
    %p80 = scmp.eq.s32.totalorder %s14, 7
    %p81 = por %p79, %p80
    %p82 = scmp.ne.s32.totalorder %s71, %s72
    %p83 = scmp.eq.s32.totalorder %s14, 0
    %p84 = por %p82, %p83
    %p85 = scmp.ne.s32.totalorder %s71, %s72
    %p86 = scmp.eq.s32.totalorder %s15, 7
    %p87 = por %p85, %p86
    %p89 = scmp.ne.s32.totalorder %s72, %s88
    %p90 = scmp.eq.s32.totalorder %s15, 0
    %p91 = por %p89, %p90
    %s92 = ssub.s32 %s16, %s35
    %s93 = ssub.s32 %s18, %s27
    %s94 = sor.u32 %s92, %s93
    %p95 = scmp.eq.s32.totalorder %s94, 0
    %s97 = sadd.s32 %s96, 1
    %s98 = scalar_select %p95, %s96, %s97
    %p101 = pneg %p95
    %p102 = scmp.eq.s32.totalorder %s9, 7
    %p103 = por %p101, %p102
    %p104 = scmp.ne.s32.totalorder %s96, %s99
    %p105 = scmp.eq.s32.totalorder %s9, 0
    %p106 = por %p104, %p105
    %p107 = scmp.ne.s32.totalorder %s96, %s99
    %p108 = scmp.eq.s32.totalorder %s14, 7
    %p109 = por %p107, %p108
    %p110 = scmp.ne.s32.totalorder %s99, %s100
    %p111 = scmp.eq.s32.totalorder %s14, 0
    %p112 = por %p110, %p111
    %p113 = scmp.ne.s32.totalorder %s99, %s100
    %p114 = scmp.eq.s32.totalorder %s15, 7
    %p115 = por %p113, %p114
    %p117 = scmp.ne.s32.totalorder %s100, %s116
    %p118 = scmp.eq.s32.totalorder %s15, 0
    %p119 = por %p117, %p118
    %s120 = ssub.s32 %s16, %s35
    %s121 = ssub.s32 %s17, %s31
    %s122 = sor.u32 %s120, %s121
    %p123 = scmp.eq.s32.totalorder %s122, 0
    %s125 = sadd.s32 %s124, 1
    %s126 = scalar_select %p123, %s124, %s125
    %p129 = pneg %p123
    %p130 = scmp.eq.s32.totalorder %s9, 7
    %p131 = por %p129, %p130
    %p132 = scmp.ne.s32.totalorder %s124, %s127
    %p133 = scmp.eq.s32.totalorder %s9, 0
    %p134 = por %p132, %p133
    %p135 = scmp.ne.s32.totalorder %s124, %s127
    %p136 = scmp.eq.s32.totalorder %s14, 7
    %p137 = por %p135, %p136
    %p138 = scmp.ne.s32.totalorder %s127, %s128
    %p139 = scmp.eq.s32.totalorder %s14, 0
    %p140 = por %p138, %p139
    %p141 = scmp.ne.s32.totalorder %s127, %s128
    %p142 = scmp.eq.s32.totalorder %s15, 7
    %p143 = por %p141, %p142
    %p145 = scmp.ne.s32.totalorder %s128, %s144
    %p146 = scmp.eq.s32.totalorder %s15, 0
    %p147 = por %p145, %p146
    %p148 = scmp.le.s32.totalorder 1, %s9
    %p149 = scmp.lt.s32.totalorder %s9, 9
    %p150 = pnand %p148, %p149
    %p151 = pneg %p150
    // Predicated region
    $region9: #{gpt_forward.18} parent=5 // pred_check
      _
    $region10: #{gpt_forward.18} parent=5 // pred_check_branch
      %153 = sbr.rel (%p150) target = $region12
    $region11: #{gpt_forward.18} parent=5 // pred_region
      %s154 = ssub.s32 %s9, 1
    $region12: #{gpt_forward.18} parent=5 // pred_fallthru
      _
    %p155 = scmp.lt.s32.totalorder %s9, 8
    // Predicated region
    $region13: #{gpt_forward.18} parent=5 // pred_check
      %p156 = pneg %p155
    $region14: #{gpt_forward.18} parent=5 // pred_check_branch
      %158 = sbr.rel (%p156) target = $region16
    $region15: #{gpt_forward.18} parent=5 // pred_region
      // Predicated region
      $region17: #{gpt_forward.18} parent=15 // pred_check
        %p159 = pneg %p50
      $region18: #{gpt_forward.18} parent=15 // pred_check_branch
        %161 = sbr.rel (%p159) target = $region20
      $region19: #{gpt_forward.18} parent=15 // pred_region
        %p162 = scmp.lt.s32.totalorder %s16, 7
        %s163 = scalar_select %p162, %s16, 7
        %p164 = scmp.lt.s32.totalorder %s17, 0
        %s165 = scalar_select %p164, %s17, 0
        %s166 = sadd.s32 %s165, %s163
        %s167 = smul.addr %s166, 4
        %s168 = scalar_lea.vmem %s0, %s167
      $region20: #{gpt_forward.18} parent=15 // pred_fallthru
        _
      // Predicated region
      $region21: #{gpt_forward.18} parent=15 // pred_check
        %p169 = pneg %p78
      $region22: #{gpt_forward.18} parent=15 // pred_check_branch
        %171 = sbr.rel (%p169) target = $region24
      $region23: #{gpt_forward.18} parent=15 // pred_region
        %p172 = scmp.lt.s32.totalorder %s16, 7
        %s173 = scalar_select %p172, %s16, 7
        %p174 = scmp.lt.s32.totalorder %s18, 0
        %s175 = scalar_select %p174, %s18, 0
        %s176 = sadd.s32 %s175, %s173
        %s177 = smul.addr %s176, 4
        %s178 = scalar_lea.vmem %s1, %s177
      $region24: #{gpt_forward.18} parent=15 // pred_fallthru
        _
      // Predicated region
      $region25: #{gpt_forward.18} parent=15 // pred_check
        %p179 = pneg %p106
      $region26: #{gpt_forward.18} parent=15 // pred_check_branch
        %181 = sbr.rel (%p179) target = $region28
      $region27: #{gpt_forward.18} parent=15 // pred_region
        %p182 = scmp.lt.s32.totalorder %s16, 7
        %s183 = scalar_select %p182, %s16, 7
        %p184 = scmp.lt.s32.totalorder %s18, 0
        %s185 = scalar_select %p184, %s18, 0
        %s186 = sadd.s32 %s185, %s183
        %s187 = smul.addr %s186, 4
        %s188 = scalar_lea.vmem %s2, %s187
      $region28: #{gpt_forward.18} parent=15 // pred_fallthru
        _
    $region16: #{gpt_forward.18} parent=5 // pred_fallthru
      _
    %p189 = scmp.le.s32.totalorder 1, %s9
    %p190 = scmp.lt.s32.totalorder %s9, 9
    %p191 = pnand %p189, %p190
    %p192 = pneg %p191
    // Predicated region
    $region29: #{gpt_forward.18} parent=5 // pred_check
      _
    $region30: #{gpt_forward.18} parent=5 // pred_check_branch
      %194 = sbr.rel (%p191) target = $region32
    $region31: #{gpt_forward.18} parent=5 // pred_region
      %s195 = ssub.s32 %s9, 1
      %p196 = scmp.lt.s32.totalorder %s19, 7
      %s197 = scalar_select %p196, %s19, 7
      %p198 = scmp.lt.s32.totalorder %s20, 0
      %s199 = scalar_select %p198, %s20, 0
      %s200 = sadd.s32 %s199, %s197
      %s201 = smul.addr %s200, 4
      %s202 = scalar_lea.vmem %s0, %s201
      %p203 = pneg %p56
      %p204 = pneg %p53
      %p205 = scmp.lt.s32.totalorder %s19, 7
      %s206 = scalar_select %p205, %s19, 7
      %p207 = scmp.lt.s32.totalorder %s21, 0
      %s208 = scalar_select %p207, %s21, 0
      %s209 = sadd.s32 %s208, %s206
      %s210 = smul.addr %s209, 4
      %s211 = scalar_lea.vmem %s1, %s210
      %p212 = pneg %p84
      %p213 = pneg %p81
      %p214 = scmp.lt.s32.totalorder %s19, 7
      %s215 = scalar_select %p214, %s19, 7
      %p216 = scmp.lt.s32.totalorder %s21, 0
      %s217 = scalar_select %p216, %s21, 0
      %s218 = sadd.s32 %s217, %s215
      %s219 = smul.addr %s218, 4
      %s220 = scalar_lea.vmem %s2, %s219
      %p221 = pneg %p112
      %p222 = pneg %p109
      %p223 = pneg %p140
      %p224 = pneg %p137
      %p225 = scmp.lt.s32.totalorder %s19, 7
      %s226 = scalar_select %p225, %s19, 7
      %p227 = scmp.lt.s32.totalorder %s20, 0
      %s228 = scalar_select %p227, %s20, 0
      %s229 = sadd.s32 %s228, %s226
      %s230 = smul.addr %s229, 4
      %s231 = scalar_lea.vmem %s3, %s230
      %p232 = scmp.lt.s32.totalorder %s19, 7
      %s233 = scalar_select %p232, %s19, 7
      %p234 = scmp.lt.s32.totalorder %s20, 0
      %s235 = scalar_select %p234, %s20, 0
      %s236 = sadd.s32 %s235, %s233
      %s237 = smul.addr %s236, 4
      %s238 = scalar_lea.vmem %s0, %s237
      %p239 = scmp.lt.s32.totalorder %s19, 7
      %s240 = scalar_select %p239, %s19, 7
      %p241 = scmp.lt.s32.totalorder %s21, 0
      %s242 = scalar_select %p241, %s21, 0
      %s243 = sadd.s32 %s242, %s240
      %s244 = smul.addr %s243, 4
      %s245 = scalar_lea.vmem %s1, %s244
      %p246 = scmp.lt.s32.totalorder %s19, 7
      %s247 = scalar_select %p246, %s19, 7
      %p248 = scmp.lt.s32.totalorder %s21, 0
      %s249 = scalar_select %p248, %s21, 0
      %s250 = sadd.s32 %s249, %s247
      %s251 = smul.addr %s250, 4
      %s252 = scalar_lea.vmem %s2, %s251
      %p253 = scmp.lt.s32.totalorder %s19, 7
      %s254 = scalar_select %p253, %s19, 7
      %p255 = scmp.lt.s32.totalorder %s20, 0
      %s256 = scalar_select %p255, %s20, 0
      %s257 = sadd.s32 %s256, %s254
      %s258 = smul.addr %s257, 4
      %s259 = scalar_lea.vmem %s3, %s258
      %p261 = scmp.eq.s32.totalorder %s21, 0
      // Predicated region
      $region33: #{gpt_forward.18} parent=31 // pred_check
        %p262 = pneg %p261
      $region34: #{gpt_forward.18} parent=31 // pred_check_branch
        %264 = sbr.rel (%p262) target = $region36
      $region35: #{gpt_forward.18} parent=31 // pred_region
        %vm265 = vcmask 7168
        %266 = vst.msk [vmem:[#allocation2] sm:$0xff] %vm265, -1e+30
        %267 = vst.msk [vmem:[#allocation3] sm:$0xff] %vm265, 0.0
        %vm268 = vcmask 64512
        %269 = vst.msk [vmem:[#allocation4] sm:$0xff] %vm268, 0.0
      $region36: #{gpt_forward.18} parent=31 // pred_fallthru
        _
      %p270 = scmp.le.s32.totalorder %s21, %s20
      // Predicated region
      $region37: #{gpt_forward.18} parent=31 // pred_check
        %p271 = pneg %p270
      $region38: #{gpt_forward.18} parent=31 // pred_check_branch
        %273 = sbr.rel (%p271) target = $region40
      $region39: #{gpt_forward.18} parent=31 // pred_region
        %v274 = vld [vmem:[%s238] sm:$0xf]
        %v275 = vld [vmem:[%s245] sm:$0xf]
        %vm276 = vcmask 64512
        %v278 = vsel %vm276, %v274, 0
        %v281 = vsel %vm276, %v275, 0
        %283 = vmatprep.subr.bf16.mxu0 0
        %284 = vmatpush1.bf16.xpose.msra.mxu0 %v281
        %285 = vmatprep.subr.bf16.mxu0 0
        %286 = vmatpush1.bf16.xpose.msra.mxu0 0
        %287 = vmatprep.subr.bf16.mxu0 0
        %288 = vmatpush1.bf16.xpose.msra.mxu0 0
        %289 = vmatprep.subr.bf16.mxu0 0
        %290 = vmatpush1.bf16.xpose.msra.mxu0 0
        %291 = vmatprep.subr.bf16.mxu0 0
        %292 = vmatpush1.bf16.xpose.msra.mxu0 0
        %293 = vmatprep.subr.bf16.mxu0 0
        %294 = vmatpush1.bf16.xpose.msra.mxu0 0
        %295 = vmatprep.subr.bf16.mxu0 0
        %296 = vmatpush1.bf16.xpose.msra.mxu0 0
        %297 = vmatprep.subr.bf16.mxu0 0
        %298 = vmatpush1.bf16.xpose.msra.mxu0 0
        %299 = vmatprep.subr.bf16.mxu0 0
        %300 = vmatpush1.bf16.xpose.msra.mxu0 0
        %301 = vmatprep.subr.bf16.mxu0 0
        %302 = vmatpush1.bf16.xpose.msra.mxu0 0
        %303 = vmatprep.subr.bf16.mxu0 0
        %304 = vmatpush1.bf16.xpose.msra.mxu0 0
        %305 = vmatprep.subr.bf16.mxu0 0
        %306 = vmatpush1.bf16.xpose.msra.mxu0 0
        %307 = vmatprep.subr.bf16.mxu0 0
        %308 = vmatpush1.bf16.xpose.msra.mxu0 0
        %309 = vmatprep.subr.bf16.mxu0 0
        %310 = vmatpush1.bf16.xpose.msra.mxu0 0
        %311 = vmatprep.subr.bf16.mxu0 0
        %312 = vmatpush1.bf16.xpose.msra.mxu0 0
        %313 = vmatprep.subr.bf16.mxu0 0
        %314 = vmatpush1.bf16.xpose.msra.mxu0 0
        %315 = vmatprep.mubr.bf16.mxu0 0
        %316 = vmatmul.mubr.bf16.gmra.mrb[0].mxu0 %v278
        %v317 = vpop.f32.mrb[0].mxu0
        %v318 = vadd.f32 0.0, %v317
        %v319 = vpop.f32.mrb[0].mxu0
        %v320 = vpop.f32.mrb[0].mxu0
        %v321 = vpop.f32.mrb[0].mxu0
        %322 = vdwg.mxu0
        %v323 = vmul.f32 %v318, 0.35355338
        %s324 = smul.u32 %s20, 8
        %v325 = vlaneseq
        %v326 = vshrl.u32 %v325, 7
        %v327 = vstv %s324
        %v328 = vadd.s32 %v327, %v326
        %s329 = smul.u32 %s21, 8
        %v330 = vlaneseq
        %v331 = vand.u32 %v330, 127
        %v332 = vstv %s329
        %v333 = vadd.s32 %v332, %v331
        %vm334 = vcmp.le.s32.totalorder %v333, %v328
        %v335 = vsel %vm334, %v323, -1e+30
        %v336 = vld [vmem:[#allocation2] sm:$0xff]
        %v337 = vsel %vm276, %v335, -inf
        %338 = vmax.xlane.f32.xlu0 %v337
        %v339 = vpop.xlane.xlu0 %338
        %v340 = vmax.f32 %v336, %v339
        %v341 = vsub.f32 %v336, %v340
        %v342 = vmul.f32 %v341, 1.442695
        %v343 = vpow.pop %v342
        %345 = vset.pattern.permute.xlu0 0
        %346 = vperm.xlu0 %345, %v340
        %v347 = vpop.permute.xlu0 %346
        %v349 = vsub.f32 %v335, %v347
        %v350 = vmul.f32 %v349, 1.442695
        %v351 = vpow.pop %v350
        %v352 = vld [vmem:[#allocation3] sm:$0xff]
        %v353 = vmul.f32 %v343, %v352
        %v354 = vsel %vm276, %v351, 0.0
        %355 = vadd.xlane.f32.xlu0 %v354
        %v356 = vpop.xlane.xlu0 %355
        %v357 = vadd.f32 %v353, %v356
        %vm358 = vcmask 7168
        %359 = vst.msk [vmem:[#allocation3] sm:$0xff] %vm358, %v357
        %v360 = vld [vmem:[#allocation4] sm:$0xff]
        %362 = vset.pattern.permute.xlu0 0
        %363 = vperm.xlu0 %362, %v343
        %v364 = vpop.permute.xlu0 %363
        %v366 = vmul.f32 %v364, %v360
        %v367 = vpack.c.bf16 %v351, %v351
        %v368 = vld [vmem:[%s252] sm:$0xf]
        %v370 = vsel %vm276, %v367, 0
        %vm372 = vcmask 1043456
        %v374 = vsel %vm372, %v368, 0
        %376 = vmatprep.subr.bf16.mxu0 0
        %377 = vmatpush1.bf16.msra.mxu0 %v374
        %378 = vmatprep.subr.bf16.mxu0 0
        %379 = vmatpush1.bf16.msra.mxu0 0
        %380 = vmatprep.subr.bf16.mxu0 0
        %381 = vmatpush1.bf16.msra.mxu0 0
        %382 = vmatprep.subr.bf16.mxu0 0
        %383 = vmatpush1.bf16.msra.mxu0 0
        %384 = vmatprep.subr.bf16.mxu0 0
        %385 = vmatpush1.bf16.msra.mxu0 0
        %386 = vmatprep.subr.bf16.mxu0 0
        %387 = vmatpush1.bf16.msra.mxu0 0
        %388 = vmatprep.subr.bf16.mxu0 0
        %389 = vmatpush1.bf16.msra.mxu0 0
        %390 = vmatprep.subr.bf16.mxu0 0
        %391 = vmatpush1.bf16.msra.mxu0 0
        %392 = vmatprep.subr.bf16.mxu0 0
        %393 = vmatpush1.bf16.msra.mxu0 0
        %394 = vmatprep.subr.bf16.mxu0 0
        %395 = vmatpush1.bf16.msra.mxu0 0
        %396 = vmatprep.subr.bf16.mxu0 0
        %397 = vmatpush1.bf16.msra.mxu0 0
        %398 = vmatprep.subr.bf16.mxu0 0
        %399 = vmatpush1.bf16.msra.mxu0 0
        %400 = vmatprep.subr.bf16.mxu0 0
        %401 = vmatpush1.bf16.msra.mxu0 0
        %402 = vmatprep.subr.bf16.mxu0 0
        %403 = vmatpush1.bf16.msra.mxu0 0
        %404 = vmatprep.subr.bf16.mxu0 0
        %405 = vmatpush1.bf16.msra.mxu0 0
        %406 = vmatprep.subr.bf16.mxu0 0
        %407 = vmatpush1.bf16.msra.mxu0 0
        %408 = vmatprep.mubr.bf16.mxu0 0
        %409 = vmatmul.mubr.bf16.gmra.mrb[0].mxu0 %v370
        %v410 = vpop.f32.mrb[0].mxu0
        %v411 = vadd.f32 0.0, %v410
        %v412 = vpop.f32.mrb[0].mxu0
        %v413 = vpop.f32.mrb[0].mxu0
        %v414 = vpop.f32.mrb[0].mxu0
        %415 = vdwg.mxu0
        %v416 = vadd.f32 %v366, %v411
        %417 = vst.msk [vmem:[#allocation4] sm:$0xff] %vm276, %v416
        %418 = vst.msk [vmem:[#allocation2] sm:$0xff] %vm358, %v340
      $region40: #{gpt_forward.18} parent=31 // pred_fallthru
        _
      // Predicated region
      $region41: #{gpt_forward.18} parent=31 // pred_check
        %p419 = pneg %p261
      $region42: #{gpt_forward.18} parent=31 // pred_check_branch
        %421 = sbr.rel (%p419) target = $region44
      $region43: #{gpt_forward.18} parent=31 // pred_region
        %v422 = vld [vmem:[#allocation3] sm:$0xff]
        %vm423 = vcmp.eq.f32.partialorder %v422, 0.0
        %v424 = vsel %vm423, 1.0, %v422
        %v425 = vrcp.pop %v424
        %v426 = vld [vmem:[#allocation4] sm:$0xff]
        %428 = vset.pattern.permute.xlu0 0
        %429 = vperm.xlu0 %428, %v425
        %v430 = vpop.permute.xlu0 %429
        %v432 = vmul.f32 %v426, %v430
        %v433 = vpack.c.bf16 %v432, %v432
        %vm434 = vcmask 60416
        %435 = vst.msk [vmem:[%s259] sm:$0xf] %vm434, %v433
      $region44: #{gpt_forward.18} parent=31 // pred_fallthru
        _
      %p436 = scmp.lt.s32.totalorder %s19, 7
      %s437 = scalar_select %p436, %s19, 7
      %p438 = scmp.lt.s32.totalorder %s20, 0
      %s439 = scalar_select %p438, %s20, 0
      %s440 = sadd.s32 %s439, %s437
      %s441 = smul.addr %s440, 4
      %s442 = scalar_lea.vmem %s3, %s441
      // Predicated region
      $region45: #{gpt_forward.18} parent=31 // pred_check
        %p443 = pneg %p137
      $region46: #{gpt_forward.18} parent=31 // pred_check_branch
        %445 = sbr.rel (%p443) target = $region48
      $region47: #{gpt_forward.18} parent=31 // pred_region
        _
      $region48: #{gpt_forward.18} parent=31 // pred_fallthru
        _
    $region32: #{gpt_forward.18} parent=5 // pred_fallthru
      _
    %p446 = scmp.le.s32.totalorder 2, %s9
    // Predicated region
    $region49: #{gpt_forward.18} parent=5 // pred_check
      %p447 = pneg %p446
    $region50: #{gpt_forward.18} parent=5 // pred_check_branch
      %449 = sbr.rel (%p447) target = $region52
    $region51: #{gpt_forward.18} parent=5 // pred_region
      %s450 = ssub.s32 %s9, 2
      // Predicated region
      $region53: #{gpt_forward.18} parent=51 // pred_check
        %p451 = pneg %p143
      $region54: #{gpt_forward.18} parent=51 // pred_check_branch
        %453 = sbr.rel (%p451) target = $region56
      $region55: #{gpt_forward.18} parent=51 // pred_region
        %p454 = scmp.lt.s32.totalorder %s22, 7
        %s455 = scalar_select %p454, %s22, 7
        %p456 = scmp.lt.s32.totalorder %s23, 0
        %s457 = scalar_select %p456, %s23, 0
        %s458 = sadd.s32 %s457, %s455
        %s459 = smul.addr %s458, 4
        %s460 = scalar_lea.vmem %s3, %s459
      $region56: #{gpt_forward.18} parent=51 // pred_fallthru
        _
    $region52: #{gpt_forward.18} parent=5 // pred_fallthru
      _
  $region6: #{gpt_forward.18} parent=0 // loop_footer
    %s13 = sadd.s32 1, %s9
  $region7: #{gpt_forward.18} parent=0 // loop_footer_branch
    %8 = sbr.rel target = $region3
  $region8: #{gpt_forward.18} parent=0 // loop_exit
    _

// kernel: gpt_forward.31
$region0: #{gpt_forward.31}
  #allocation0 [shape = 'u32[]', space=smem, size = 0x4, offset = 0x4, fixed_abs, tag = 'smem constant byte address 0x4 - core index']
  #allocation1 [shape = 'u32[144,128]{1,0:T(1,128)}', space=vmem, size = 0x12000, scoped, tag = 'internal scratch']
  #allocation2 [shape = 'f32[16,128]{1,0:T(8,128)}', space=vmem, size = 0x2000, scoped, tag = 'scratch operand']
  %s0 = inlined_call_operand.vmem [shape: bf16[16,128], index: 0, kind: input, shape index: {}]
  %s1 = inlined_call_operand.vmem [shape: bf16[128,128], index: 1, kind: input, shape index: {}]
  %s2 = inlined_call_operand.hbm [shape: f32[16,128], index: 2, kind: output, shape index: {}]
  %s3 = sld [smem:[#allocation0]]
  $region26: #{gpt_forward.31} parent=0
    _
  %s5 = ssub.s32 1, %s3
  %s6 = scalar_select 0, %s5, %s3
  $region1: #{gpt_forward.31} parent=0
    #allocation3 [shape = 'u8[8192]{0}', space=vmem, size = 0x2000, scoped, tag = 'output window, operand 0, single buffered']
    #allocation4 [shape = 's32[1]{0}', space=sflag, size = 0x4, scoped, tag = 'scoped memory for gpt_forward.31']
    %7 = vsyncpa [#allocation4], 0
    // Predicated region
    $region2: #{gpt_forward.31} parent=1 // pred_check
      _
    $region3: #{gpt_forward.31} parent=1 // pred_check_branch
      %9 = sbr.rel (0) target = $region5
    $region4: #{gpt_forward.31} parent=1 // pred_region
      _
    $region5: #{gpt_forward.31} parent=1 // pred_fallthru
      _
    // Predicated region
    $region6: #{gpt_forward.31} parent=1 // pred_check
      _
    $region7: #{gpt_forward.31} parent=1 // pred_check_branch
      %11 = sbr.rel (0) target = $region9
    $region8: #{gpt_forward.31} parent=1 // pred_region
      _
    $region9: #{gpt_forward.31} parent=1 // pred_fallthru
      _
    %p13 = scmp.eq.s32.totalorder 0, 0
    // Predicated region
    $region10: #{gpt_forward.31} parent=1 // pred_check
      %p14 = pneg %p13
    $region11: #{gpt_forward.31} parent=1 // pred_check_branch
      %16 = sbr.rel (%p14) target = $region13
    $region12: #{gpt_forward.31} parent=1 // pred_region
      %17 = vst [vmem:[#allocation2] sm:$0xff] 0.0
      %18 = vst [vmem:[#allocation2 + $0x8] sm:$0xff] 0.0
    $region13: #{gpt_forward.31} parent=1 // pred_fallthru
      _
    %v19 = vld [vmem:[#allocation2] sm:$0xff]
    %v20 = vld [vmem:[#allocation2 + $0x8] sm:$0xff]
    %v21 = vld [vmem:[%s0] sm:$0xf]
    %v22 = vld [vmem:[%s0 + $0x4] sm:$0xf]
    %v23 = vld [vmem:[%s1] sm:$0xf]
    %v24 = vld [vmem:[%s1 + $0x4] sm:$0xf]
    %v25 = vld [vmem:[%s1 + $0x8] sm:$0xf]
    %v26 = vld [vmem:[%s1 + $0xc] sm:$0xf]
    %v27 = vld [vmem:[%s1 + $0x10] sm:$0xf]
    %v28 = vld [vmem:[%s1 + $0x14] sm:$0xf]
    %v29 = vld [vmem:[%s1 + $0x18] sm:$0xf]
    %v30 = vld [vmem:[%s1 + $0x1c] sm:$0xf]
    %v31 = vld [vmem:[%s1 + $0x20] sm:$0xf]
    %v32 = vld [vmem:[%s1 + $0x24] sm:$0xf]
    %v33 = vld [vmem:[%s1 + $0x28] sm:$0xf]
    %v34 = vld [vmem:[%s1 + $0x2c] sm:$0xf]
    %v35 = vld [vmem:[%s1 + $0x30] sm:$0xf]
    %v36 = vld [vmem:[%s1 + $0x34] sm:$0xf]
    %v37 = vld [vmem:[%s1 + $0x38] sm:$0xf]
    %v38 = vld [vmem:[%s1 + $0x3c] sm:$0xf]
    %v41 = vunpack.c.l.b16 %v21
    %v42 = vunpack.c.l.b16 %v22
    %v43 = vpack.c.b16 %v42, %v41
    %v61 = vunpack.c.l.b16 %v23
    %v62 = vunpack.c.l.b16 %v24
    %v63 = vunpack.c.l.b16 %v25
    %v64 = vunpack.c.l.b16 %v26
    %v65 = vunpack.c.l.b16 %v27
    %v66 = vunpack.c.l.b16 %v28
    %v67 = vunpack.c.l.b16 %v29
    %v68 = vunpack.c.l.b16 %v30
    %v69 = vunpack.c.l.b16 %v31
    %v70 = vunpack.c.l.b16 %v32
    %v71 = vunpack.c.l.b16 %v33
    %v72 = vunpack.c.l.b16 %v34
    %v73 = vunpack.c.l.b16 %v35
    %v74 = vunpack.c.l.b16 %v36
    %v75 = vunpack.c.l.b16 %v37
    %v76 = vunpack.c.l.b16 %v38
    %v77 = vpack.c.b16 %v62, %v61
    %v78 = vpack.c.b16 %v64, %v63
    %v79 = vpack.c.b16 %v66, %v65
    %v80 = vpack.c.b16 %v68, %v67
    %v81 = vpack.c.b16 %v70, %v69
    %v82 = vpack.c.b16 %v72, %v71
    %v83 = vpack.c.b16 %v74, %v73
    %v84 = vpack.c.b16 %v76, %v75
    %93 = vmatprep.subr.bf16.mxu0 0
    %94 = vmatpush1.bf16.msra.mxu0 %v77
    %95 = vmatprep.subr.bf16.mxu0 0
    %96 = vmatpush1.bf16.msra.mxu0 %v78
    %97 = vmatprep.subr.bf16.mxu0 0
    %98 = vmatpush1.bf16.msra.mxu0 %v79
    %99 = vmatprep.subr.bf16.mxu0 0
    %100 = vmatpush1.bf16.msra.mxu0 %v80
    %101 = vmatprep.subr.bf16.mxu0 0
    %102 = vmatpush1.bf16.msra.mxu0 %v81
    %103 = vmatprep.subr.bf16.mxu0 0
    %104 = vmatpush1.bf16.msra.mxu0 %v82
    %105 = vmatprep.subr.bf16.mxu0 0
    %106 = vmatpush1.bf16.msra.mxu0 %v83
    %107 = vmatprep.subr.bf16.mxu0 0
    %108 = vmatpush1.bf16.msra.mxu0 %v84
    %109 = vmatprep.subr.bf16.mxu0 0
    %110 = vmatpush1.bf16.msra.mxu0 0
    %111 = vmatprep.subr.bf16.mxu0 0
    %112 = vmatpush1.bf16.msra.mxu0 0
    %113 = vmatprep.subr.bf16.mxu0 0
    %114 = vmatpush1.bf16.msra.mxu0 0
    %115 = vmatprep.subr.bf16.mxu0 0
    %116 = vmatpush1.bf16.msra.mxu0 0
    %117 = vmatprep.subr.bf16.mxu0 0
    %118 = vmatpush1.bf16.msra.mxu0 0
    %119 = vmatprep.subr.bf16.mxu0 0
    %120 = vmatpush1.bf16.msra.mxu0 0
    %121 = vmatprep.subr.bf16.mxu0 0
    %122 = vmatpush1.bf16.msra.mxu0 0
    %123 = vmatprep.subr.bf16.mxu0 0
    %124 = vmatpush1.bf16.msra.mxu0 0
    %125 = vmatprep.mubr.bf16.mxu0 0
    %126 = vmatmul.mubr.bf16.gmra.mrb[0].mxu0 %v43
    %v127 = vpop.f32.mrb[0].mxu0
    %v128 = vadd.f32 0.0, %v127
    %v129 = vpop.f32.mrb[0].mxu0
    %v130 = vpop.f32.mrb[0].mxu0
    %v131 = vadd.f32 0.0, %v130
    %v132 = vpop.f32.mrb[0].mxu0
    %133 = vdwg.mxu0
    %v134 = vadd.f32 %v19, %v128
    %v135 = vadd.f32 %v20, %v131
    %136 = vst [vmem:[#allocation2] sm:$0xff] %v134
    %137 = vst [vmem:[#allocation2 + $0x8] sm:$0xff] %v135
    // Predicated region
    $region14: #{gpt_forward.31} parent=1 // pred_check
      %p138 = pneg %p13
    $region15: #{gpt_forward.31} parent=1 // pred_check_branch
      %140 = sbr.rel (%p138) target = $region17
    $region16: #{gpt_forward.31} parent=1 // pred_region
      %v141 = vld [vmem:[#allocation2] sm:$0xff]
      %v142 = vld [vmem:[#allocation2 + $0x8] sm:$0xff]
      %143 = vst [vmem:[#allocation3] sm:$0xff] %v141
      %144 = vst [vmem:[#allocation3 + $0x8] sm:$0xff] %v142
    $region17: #{gpt_forward.31} parent=1 // pred_fallthru
      _
    // Predicated region
    $region18: #{gpt_forward.31} parent=1 // pred_check
      _
    $region19: #{gpt_forward.31} parent=1 // pred_check_branch
      %146 = sbr.rel (0) target = $region21
    $region20: #{gpt_forward.31} parent=1 // pred_region
      %s148 = ssub.s32 256, 256
      %149 = vsyncadd [#allocation4], %s148
      %s150 = sshll.u32 [#allocation3], 4
      %s151 = int_to_ptr.vmem [resolvable:$true] %s150
      %156 = dma.vmem_to_hbm [thread:$0]  %s151, 256, %s2, [#allocation4], 128, 128, 8
    $region21: #{gpt_forward.31} parent=1 // pred_fallthru
      _
    // Predicated region
    $region22: #{gpt_forward.31} parent=1 // pred_check
      _
    $region23: #{gpt_forward.31} parent=1 // pred_check_branch
      %158 = sbr.rel (0) target = $region25
    $region24: #{gpt_forward.31} parent=1 // pred_region
      %159 = dma.done [#allocation4], 256
    $region25: #{gpt_forward.31} parent=1 // pred_fallthru
      _
    %160 = vsyncpa [#allocation4], 1

// kernel: gpt_forward.21
$region0: #{gpt_forward.21}
  #allocation0 [shape = 'u32[]', space=smem, size = 0x4, offset = 0x4, fixed_abs, tag = 'smem constant byte address 0x4 - core index']
  #allocation1 [shape = 'u32[144,128]{1,0:T(1,128)}', space=vmem, size = 0x12000, scoped, tag = 'internal scratch']
  #allocation2 [shape = 'f32[16,128]{1,0:T(8,128)}', space=vmem, size = 0x2000, scoped, tag = 'scratch operand']
  %s0 = inlined_call_operand.vmem [shape: bf16[16,128], index: 0, kind: input, shape index: {}]
  %s1 = inlined_call_operand.vmem [shape: bf16[128,128], index: 1, kind: input, shape index: {}]
  %s2 = inlined_call_operand.vmem [shape: f32[1,128], index: 2, kind: input, shape index: {}]
  %s3 = inlined_call_operand.vmem [shape: bf16[16,128], index: 3, kind: output, shape index: {}]
  %s4 = sld [smem:[#allocation0]]
  $region30: #{gpt_forward.21} parent=0
    _
  %s6 = ssub.s32 1, %s4
  %s7 = scalar_select 0, %s6, %s4
  // Predicated region
  $region2: #{gpt_forward.21} parent=0 // pred_check
    _
  $region3: #{gpt_forward.21} parent=0 // pred_check_branch
    %9 = sbr.rel (0) target = $region5
  $region4: #{gpt_forward.21} parent=0 // pred_region
    _
  $region5: #{gpt_forward.21} parent=0 // pred_fallthru
    _
  // Predicated region
  $region6: #{gpt_forward.21} parent=0 // pred_check
    _
  $region7: #{gpt_forward.21} parent=0 // pred_check_branch
    %11 = sbr.rel (0) target = $region9
  $region8: #{gpt_forward.21} parent=0 // pred_region
    _
  $region9: #{gpt_forward.21} parent=0 // pred_fallthru
    _
  // Predicated region
  $region10: #{gpt_forward.21} parent=0 // pred_check
    _
  $region11: #{gpt_forward.21} parent=0 // pred_check_branch
    %13 = sbr.rel (0) target = $region13
  $region12: #{gpt_forward.21} parent=0 // pred_region
    _
  $region13: #{gpt_forward.21} parent=0 // pred_fallthru
    _
  %p15 = scmp.eq.s32.totalorder 0, 0
  // Predicated region
  $region14: #{gpt_forward.21} parent=0 // pred_check
    %p16 = pneg %p15
  $region15: #{gpt_forward.21} parent=0 // pred_check_branch
    %18 = sbr.rel (%p16) target = $region17
  $region16: #{gpt_forward.21} parent=0 // pred_region
    %19 = vst [vmem:[#allocation2] sm:$0xff] 0.0
    %20 = vst [vmem:[#allocation2 + $0x8] sm:$0xff] 0.0
  $region17: #{gpt_forward.21} parent=0 // pred_fallthru
    _
  %v21 = vld [vmem:[#allocation2] sm:$0xff]
  %v22 = vld [vmem:[#allocation2 + $0x8] sm:$0xff]
  %v23 = vld [vmem:[%s0] sm:$0xf]
  %v24 = vld [vmem:[%s0 + $0x4] sm:$0xf]
  %v25 = vld [vmem:[%s1] sm:$0xf]
  %v26 = vld [vmem:[%s1 + $0x4] sm:$0xf]
  %v27 = vld [vmem:[%s1 + $0x8] sm:$0xf]
  %v28 = vld [vmem:[%s1 + $0xc] sm:$0xf]
  %v29 = vld [vmem:[%s1 + $0x10] sm:$0xf]
  %v30 = vld [vmem:[%s1 + $0x14] sm:$0xf]
  %v31 = vld [vmem:[%s1 + $0x18] sm:$0xf]
  %v32 = vld [vmem:[%s1 + $0x1c] sm:$0xf]
  %v33 = vld [vmem:[%s1 + $0x20] sm:$0xf]
  %v34 = vld [vmem:[%s1 + $0x24] sm:$0xf]
  %v35 = vld [vmem:[%s1 + $0x28] sm:$0xf]
  %v36 = vld [vmem:[%s1 + $0x2c] sm:$0xf]
  %v37 = vld [vmem:[%s1 + $0x30] sm:$0xf]
  %v38 = vld [vmem:[%s1 + $0x34] sm:$0xf]
  %v39 = vld [vmem:[%s1 + $0x38] sm:$0xf]
  %v40 = vld [vmem:[%s1 + $0x3c] sm:$0xf]
  %v43 = vunpack.c.l.b16 %v23
  %v44 = vunpack.c.l.b16 %v24
  %v45 = vpack.c.b16 %v44, %v43
  %v63 = vunpack.c.l.b16 %v25
  %v64 = vunpack.c.l.b16 %v26
  %v65 = vunpack.c.l.b16 %v27
  %v66 = vunpack.c.l.b16 %v28
  %v67 = vunpack.c.l.b16 %v29
  %v68 = vunpack.c.l.b16 %v30
  %v69 = vunpack.c.l.b16 %v31
  %v70 = vunpack.c.l.b16 %v32
  %v71 = vunpack.c.l.b16 %v33
  %v72 = vunpack.c.l.b16 %v34
  %v73 = vunpack.c.l.b16 %v35
  %v74 = vunpack.c.l.b16 %v36
  %v75 = vunpack.c.l.b16 %v37
  %v76 = vunpack.c.l.b16 %v38
  %v77 = vunpack.c.l.b16 %v39
  %v78 = vunpack.c.l.b16 %v40
  %v79 = vpack.c.b16 %v64, %v63
  %v80 = vpack.c.b16 %v66, %v65
  %v81 = vpack.c.b16 %v68, %v67
  %v82 = vpack.c.b16 %v70, %v69
  %v83 = vpack.c.b16 %v72, %v71
  %v84 = vpack.c.b16 %v74, %v73
  %v85 = vpack.c.b16 %v76, %v75
  %v86 = vpack.c.b16 %v78, %v77
  %95 = vmatprep.subr.bf16.mxu0 0
  %96 = vmatpush1.bf16.msra.mxu0 %v79
  %97 = vmatprep.subr.bf16.mxu0 0
  %98 = vmatpush1.bf16.msra.mxu0 %v80
  %99 = vmatprep.subr.bf16.mxu0 0
  %100 = vmatpush1.bf16.msra.mxu0 %v81
  %101 = vmatprep.subr.bf16.mxu0 0
  %102 = vmatpush1.bf16.msra.mxu0 %v82
  %103 = vmatprep.subr.bf16.mxu0 0
  %104 = vmatpush1.bf16.msra.mxu0 %v83
  %105 = vmatprep.subr.bf16.mxu0 0
  %106 = vmatpush1.bf16.msra.mxu0 %v84
  %107 = vmatprep.subr.bf16.mxu0 0
  %108 = vmatpush1.bf16.msra.mxu0 %v85
  %109 = vmatprep.subr.bf16.mxu0 0
  %110 = vmatpush1.bf16.msra.mxu0 %v86
  %111 = vmatprep.subr.bf16.mxu0 0
  %112 = vmatpush1.bf16.msra.mxu0 0
  %113 = vmatprep.subr.bf16.mxu0 0
  %114 = vmatpush1.bf16.msra.mxu0 0
  %115 = vmatprep.subr.bf16.mxu0 0
  %116 = vmatpush1.bf16.msra.mxu0 0
  %117 = vmatprep.subr.bf16.mxu0 0
  %118 = vmatpush1.bf16.msra.mxu0 0
  %119 = vmatprep.subr.bf16.mxu0 0
  %120 = vmatpush1.bf16.msra.mxu0 0
  %121 = vmatprep.subr.bf16.mxu0 0
  %122 = vmatpush1.bf16.msra.mxu0 0
  %123 = vmatprep.subr.bf16.mxu0 0
  %124 = vmatpush1.bf16.msra.mxu0 0
  %125 = vmatprep.subr.bf16.mxu0 0
  %126 = vmatpush1.bf16.msra.mxu0 0
  %127 = vmatprep.mubr.bf16.mxu0 0
  %128 = vmatmul.mubr.bf16.gmra.mrb[0].mxu0 %v45
  %v129 = vpop.f32.mrb[0].mxu0
  %v130 = vadd.f32 0.0, %v129
  %v131 = vpop.f32.mrb[0].mxu0
  %v132 = vpop.f32.mrb[0].mxu0
  %v133 = vadd.f32 0.0, %v132
  %v134 = vpop.f32.mrb[0].mxu0
  %135 = vdwg.mxu0
  %v136 = vadd.f32 %v21, %v130
  %v137 = vadd.f32 %v22, %v133
  %138 = vst [vmem:[#allocation2] sm:$0xff] %v136
  %139 = vst [vmem:[#allocation2 + $0x8] sm:$0xff] %v137
  // Predicated region
  $region18: #{gpt_forward.21} parent=0 // pred_check
    %p140 = pneg %p15
  $region19: #{gpt_forward.21} parent=0 // pred_check_branch
    %142 = sbr.rel (%p140) target = $region21
  $region20: #{gpt_forward.21} parent=0 // pred_region
    %v143 = vld [vmem:[#allocation2] sm:$0xff]
    %v144 = vld [vmem:[#allocation2 + $0x8] sm:$0xff]
    %v145 = vld [vmem:[%s2] sm:$0x1]
    %v147 = vlaneseq
    %v148 = vshrl.u32 %v147, 7
    %v149 = vsub.s32 0, %v148
    %v150 = vrot.slane %v145, %v149
    %v152 = vadd.f32 %v143, %v150
    %v153 = vadd.f32 %v144, %v150
    %v154 = vmul.f32 %v152, 0.5
    %v155 = vmul.f32 %v153, 0.5
    %v156 = vmul.f32 %v152, 0.044715
    %v157 = vmul.f32 %v153, 0.044715
    %v158 = vmul.f32 %v156, %v152
    %v159 = vmul.f32 %v157, %v153
    %v160 = vmul.f32 %v158, %v152
    %v161 = vmul.f32 %v159, %v153
    %v162 = vadd.f32 %v152, %v160
    %v163 = vadd.f32 %v153, %v161
    %v164 = vmul.f32 %v162, 0.7978846
    %v165 = vmul.f32 %v163, 0.7978846
    %v166 = vtanh.pop %v164
    %v167 = vtanh.pop %v165
    %v168 = vadd.f32 %v166, 1.0
    %v169 = vadd.f32 %v167, 1.0
    %v170 = vmul.f32 %v154, %v168
    %v171 = vmul.f32 %v155, %v169
    %v172 = vpack.c.bf16 %v171, %v170
    %v174 = vunpack.c.l.b16 %v172
    %v175 = vunpack.c.h.b16 %v172
    %v176 = vpack.c.b16 %v174, %v174
    %v177 = vpack.c.b16 %v175, %v175
    %180 = vst [vmem:[%s3] sm:$0xf] %v176
    %181 = vst [vmem:[%s3 + $0x4] sm:$0xf] %v177
  $region21: #{gpt_forward.21} parent=0 // pred_fallthru
    _
  // Predicated region
  $region22: #{gpt_forward.21} parent=0 // pred_check
    _
  $region23: #{gpt_forward.21} parent=0 // pred_check_branch
    %183 = sbr.rel (0) target = $region25
  $region24: #{gpt_forward.21} parent=0 // pred_region
    _
  $region25: #{gpt_forward.21} parent=0 // pred_fallthru
    _
  // Predicated region
  $region26: #{gpt_forward.21} parent=0 // pred_check
    _
  $region27: #{gpt_forward.21} parent=0 // pred_check_branch
    %185 = sbr.rel (0) target = $region29
  $region28: #{gpt_forward.21} parent=0 // pred_region
    _
  $region29: #{gpt_forward.21} parent=0 // pred_fallthru
    _

</llo_original>
